<compile_context>
chip_gen: v7x
topology: tpu7x:2x2x1
jax: 0.10.0
libtpu: 0.0.40
codegen_flags: <defaults>
</compile_context>

<pallas_src>
import functools

import jax
import jax.numpy as jnp
from jax.experimental import pallas as pl
from jax.experimental.pallas import tpu as pltpu


def _round_up(x, m):
    return ((x + m - 1) // m) * m


# ----------------------------------------------------------------------------
# CNN context-feature extractor + h2o feature half (fused), tiled over rows
# ----------------------------------------------------------------------------
def _cnn_kernel(filter_sizes, nf_pad, emb_ref, w_all_ref, b_all_ref,
                w_feat_ref, b_o_ref, out_ref):
    TN, L, E = emb_ref.shape

    # One wide bf16 MXU matmul covering every window position and conv tap.
    proj = jnp.dot(emb_ref[...].reshape(TN * L, E), w_all_ref[...],
                   preferred_element_type=jnp.float32)        # (TN*L, sum(fs)*nf_pad)
    proj = proj.reshape(TN, L, proj.shape[-1])

    pooled = []
    col = 0
    for fs in filter_sizes:
        l_out = L - fs + 1
        acc = proj[:, 0:l_out, col:col + nf_pad]
        for k in range(1, fs):                                 # static shift-adds,
            acc = acc + proj[:, k:k + l_out,                   # lane-aligned slabs
                             col + k * nf_pad:col + (k + 1) * nf_pad]
        pooled.append(jnp.max(acc, axis=1))                    # (TN, nf_pad) max-pool
        col += fs * nf_pad

    # conv bias + ReLU commute with the position max (bias is position-indep.).
    feat = jnp.maximum(jnp.concatenate(pooled, axis=-1) + b_all_ref[...], 0.0)

    # Feature half of the h2o head (keeps it off the sequential RNN path).
    out_ref[...] = (jnp.dot(feat, w_feat_ref[...], preferred_element_type=jnp.float32)
                    + b_o_ref[...]).astype(out_ref.dtype)


def cnn_head_features(ids_flat, emb_table_bf16, w_all, b_all, w_feat, b_o_row,
                      filter_sizes, nf_pad, out_dim):
    """ids_flat: (N, L) int32 (time-major order) -> (N, output_size) feature
    logits (pooled text-CNN features already projected through the feature
    columns of the h2o Linear, + its bias)."""
    N, L = ids_flat.shape
    E = emb_table_bf16.shape[-1]
    c_pad = w_all.shape[-1]
    feat_dim = w_feat.shape[0]

    # Derive block_n from a VMEM budget (emb tile x2 buffers, proj, feat, out).
    bytes_per_row = (2 * (L * E * 2)            # emb tile, bf16, double-buffered
                     + 4 * L * c_pad            # proj intermediate, f32
                     + 4 * 3 * feat_dim         # acc / pooled / feat headroom
                     + 4 * 2 * out_dim)         # out tile, double-buffered
    budget = 20 << 20                           # keeps depth-2 buffering v7x-safe
    block_n = max(8, min(512, (budget // bytes_per_row) // 8 * 8))
    block_n = min(block_n, _round_up(N, 8))
    n_pad = _round_up(N, block_n)

    ids = ids_flat if n_pad == N else jnp.pad(ids_flat, ((0, n_pad - N), (0, 0)))
    # TODO(synk): for very large vocabularies, fuse this gather into the kernel
    # (scalar-prefetch ids + per-row DMA from an HBM-resident table) instead of
    # materializing the (N, L, E) embedding tensor in HBM.
    emb = jnp.take(emb_table_bf16, ids, axis=0)               # (n_pad, L, E) bf16

    flops = 2 * n_pad * L * E * c_pad + 2 * n_pad * feat_dim * out_dim
    bytes_accessed = (2 * n_pad * L * E + 4 * n_pad * out_dim
                      + 2 * E * c_pad + 4 * feat_dim * out_dim)
    vmem_limit = int(min(48 << 20, max(32 << 20, 2 * block_n * bytes_per_row)))

    fp = pl.pallas_call(
        functools.partial(_cnn_kernel, tuple(filter_sizes), nf_pad),
        out_shape=jax.ShapeDtypeStruct((n_pad, out_dim), jnp.float32),
        grid=(n_pad // block_n,),
        in_specs=[
            pl.BlockSpec((block_n, L, E), lambda i: (i, 0, 0)),
            pl.BlockSpec(w_all.shape, lambda i: (0, 0)),
            pl.BlockSpec(b_all.shape, lambda i: (0, 0)),
            pl.BlockSpec(w_feat.shape, lambda i: (0, 0)),
            pl.BlockSpec(b_o_row.shape, lambda i: (0, 0)),
        ],
        out_specs=pl.BlockSpec((block_n, out_dim), lambda i: (i, 0)),
        compiler_params=pltpu.CompilerParams(
            dimension_semantics=("parallel",),
            vmem_limit_bytes=vmem_limit),
        cost_estimate=pl.CostEstimate(flops=int(flops), transcendentals=0,
                                      bytes_accessed=int(bytes_accessed)),
    )(emb, w_all, b_all, w_feat, b_o_row)
    return fp[:N]


# ----------------------------------------------------------------------------
# Autoregressive LSTM + h2o head: time-chunked grid, batch-on-sublanes layout,
# persistent VMEM state, small static unroll per chunk.
# ----------------------------------------------------------------------------
def _recurrence_kernel(hidden_size, out_dim, chunk,
                       fp_ref, wg_ref, bg_ref, wh_ref, out_ref,
                       state_ref, c_ref):
    H = hidden_size
    bb = state_ref.shape[0]

    @pl.when(pl.program_id(1) == 0)                # first time-chunk: zero state
    def _():
        state_ref[...] = jnp.zeros_like(state_ref)
        c_ref[...] = jnp.zeros_like(c_ref)

    wg = wg_ref[...]                               # (H + out, 4H), rows = [h | prev]
    wh = wh_ref[...]                               # (H, out)
    bg_full = jnp.broadcast_to(bg_ref[...], (bb, 4 * H))   # hoisted out of the loop

    for s in range(chunk):                         # small static unroll
        # Fused LSTM input matmul; (bb, 4H) is a single lane-dense vreg row-set.
        gates = jnp.dot(state_ref[...], wg, preferred_element_type=jnp.float32) + bg_full
        i_g = jax.nn.sigmoid(gates[:, 0 * H:1 * H])
        f_g = jax.nn.sigmoid(gates[:, 1 * H:2 * H])
        g_g = jnp.tanh(gates[:, 2 * H:3 * H])
        o_g = jax.nn.sigmoid(gates[:, 3 * H:4 * H])
        c_new = f_g * c_ref[...] + i_g * g_g
        h_new = o_g * jnp.tanh(c_new)
        # h2o head: feature half + output bias were precomputed by the CNN kernel.
        logits = fp_ref[s] + jnp.dot(h_new, wh, preferred_element_type=jnp.float32)
        pred = jax.nn.sigmoid(logits)              # (bb, out)
        out_ref[s] = pred.astype(out_ref.dtype)
        c_ref[...] = c_new
        state_ref[:, 0:H] = h_new                  # persistent [h | prev_pred] state
        state_ref[:, H:H + out_dim] = pred


def damic_recurrence(fp, wg, bg, wh, hidden_size, output_size, batch_block, chunk):
    """fp: (t_pad, b_pad, out) precomputed feature-logits -> predictions."""
    t_pad, b_pad, out_dim = fp.shape
    H = hidden_size
    grid = (b_pad // batch_block, t_pad // chunk)

    flops = t_pad * b_pad * (2 * 4 * H * (H + out_dim) + 2 * H * out_dim + 10 * H)
    transcendentals = t_pad * b_pad * (5 * H + out_dim)
    bytes_accessed = 4 * (2 * fp.size + wg.size + bg.size + wh.size)

    return pl.pallas_call(
        functools.partial(_recurrence_kernel, H, out_dim, chunk),
        out_shape=jax.ShapeDtypeStruct(fp.shape, jnp.float32),
        grid=grid,
        in_specs=[
            pl.BlockSpec((chunk, batch_block, out_dim), lambda b, t: (t, b, 0)),
            pl.BlockSpec(wg.shape, lambda b, t: (0, 0)),
            pl.BlockSpec(bg.shape, lambda b, t: (0, 0)),
            pl.BlockSpec(wh.shape, lambda b, t: (0, 0)),
        ],
        out_specs=pl.BlockSpec((chunk, batch_block, out_dim), lambda b, t: (t, b, 0)),
        scratch_shapes=[pltpu.VMEM((batch_block, H + out_dim), jnp.float32),
                        pltpu.VMEM((batch_block, H), jnp.float32)],
        compiler_params=pltpu.CompilerParams(
            dimension_semantics=("parallel", "arbitrary")),
        cost_estimate=pl.CostEstimate(flops=int(flops),
                                      transcendentals=int(transcendentals),
                                      bytes_accessed=int(bytes_accessed)),
    )(fp, wg, bg, wh)


# ----------------------------------------------------------------------------
# Full DAMIC forward (glue in plain JAX: embedding lookup, tiny layout ops)
# ----------------------------------------------------------------------------
def damic_forward(dialogue_ids, emb_table, conv_params, lstm_params, h2o_params,
                  filter_sizes, hidden_size, output_size):
    B, T, L = dialogue_ids.shape
    w_ih, w_hh, b_ih, b_hh = lstm_params          # PyTorch layout
    w_o, b_o = h2o_params                         # (out, H+input_size), (out,)
    nf = conv_params[0][0].shape[-1]
    E = emb_table.shape[-1]
    H = hidden_size
    out_dim = output_size

    # --- kernel-friendly parameter layouts (tiny, built once) -----------------
    nf_pad = _round_up(nf, 128)                   # lane-aligned per-tap slabs
    w_cols, b_cols, wfeat_rows = [], [], []
    for (w, b), fs in zip(conv_params, filter_sizes):
        for k in range(fs):
            w_cols.append(jnp.pad(w[k], ((0, 0), (0, nf_pad - nf))))   # (E, nf_pad)
        b_cols.append(jnp.pad(b, ((0, 0), (0, nf_pad - nf))))          # (1, nf_pad)
    for gi in range(len(filter_sizes)):
        rows = w_o[:, gi * nf:(gi + 1) * nf].T                          # (nf, out)
        wfeat_rows.append(jnp.pad(rows, ((0, nf_pad - nf), (0, 0))))
    input_size = len(filter_sizes) * nf
    w_all = jnp.concatenate(w_cols, axis=-1).astype(jnp.bfloat16)       # (E, sum(fs)*nf_pad)
    b_all = jnp.concatenate(b_cols, axis=-1)                            # (1, nfs*nf_pad)
    w_feat = jnp.concatenate(wfeat_rows, axis=0)                        # (nfs*nf_pad, out)
    b_o_row = b_o.reshape(1, out_dim)

    wg = jnp.concatenate([w_hh.T, w_ih.T], axis=0)                      # (H + out, 4H)
    bg = (b_ih + b_hh).reshape(1, 4 * H)                                # (1, 4H)
    wh = w_o[:, input_size:].T                                          # (H, out)

    # --- CNN features, time-major so no big-tensor transpose is needed --------
    ids_tm = jnp.transpose(dialogue_ids, (1, 0, 2)).reshape(T * B, L).astype(jnp.int32)
    fp_flat = cnn_head_features(ids_tm, emb_table.astype(jnp.bfloat16),
                                w_all, b_all, w_feat, b_o_row,
                                filter_sizes, nf_pad, out_dim)          # (T*B, out)

    # --- recurrence layout: (t_pad, b_pad, out), batch on sublanes -------------
    if B <= 128:
        bb = _round_up(max(B, 8), 8)
        b_pad = bb
    else:
        bb = 128
        b_pad = _round_up(B, 128)
    chunk = min(8, T)
    t_pad = _round_up(T, chunk)
    fp_tm = fp_flat.reshape(T, B, out_dim)
    fp_tm = jnp.pad(fp_tm, ((0, t_pad - T), (0, b_pad - B), (0, 0)))

    out_tm = damic_recurrence(fp_tm, wg, bg, wh, H, out_dim, bb, chunk)  # (t_pad,b_pad,out)
    return jnp.transpose(out_tm[:T, :B, :], (1, 0, 2))                   # (B, T, out)


# ----------------------------------------------------------------------------
# Pure-JAX reference for correctness checking (PyTorch semantics, eval mode)
# ----------------------------------------------------------------------------
def reference_forward(dialogue_ids, emb_table, conv_params, lstm_params, h2o_params,
                      filter_sizes, hidden_size, output_size):
    B, T, L = dialogue_ids.shape
    w_ih, w_hh, b_ih, b_hh = lstm_params
    w_o, b_o = h2o_params
    emb = jnp.take(emb_table, dialogue_ids.reshape(B * T, L), axis=0).astype(jnp.float32)

    pooled = []
    for (w, b), fs in zip(conv_params, filter_sizes):
        l_out = L - fs + 1
        nf = w.shape[-1]
        acc = jnp.zeros((B * T, l_out, nf), jnp.float32)
        for k in range(fs):
            acc = acc + jnp.einsum('nle,ef->nlf', emb[:, k:k + l_out, :], w[k])
        acc = jax.nn.relu(acc + b)
        pooled.append(acc.max(axis=1))
    feats = jnp.concatenate(pooled, axis=-1).reshape(B, T, -1)

    H = hidden_size
    h = jnp.zeros((B, H), jnp.float32)
    c = jnp.zeros((B, H), jnp.float32)
    prev = jnp.zeros((B, output_size), jnp.float32)
    outs = []
    for t in range(T):
        gates = prev @ w_ih.T + h @ w_hh.T + b_ih + b_hh
        i_g = jax.nn.sigmoid(gates[:, 0 * H:1 * H])
        f_g = jax.nn.sigmoid(gates[:, 1 * H:2 * H])
        g_g = jnp.tanh(gates[:, 2 * H:3 * H])
        o_g = jax.nn.sigmoid(gates[:, 3 * H:4 * H])
        c = f_g * c + i_g * g_g
        h = o_g * jnp.tanh(c)
        pred = jax.nn.sigmoid(jnp.concatenate([feats[:, t], h], axis=-1) @ w_o.T + b_o)
        outs.append(pred)
        prev = pred
    return jnp.stack(outs, axis=1)


# ----------------------------------------------------------------------------
# Main
# ----------------------------------------------------------------------------
if __name__ == "__main__":
    # Small, deterministic configuration.
    batch, timesteps, sent_len = 2, 8, 16
    vocab, emb_dim = 50, 32
    n_filters, filter_sizes = 8, (2, 3, 4)
    hidden_size, output_size = 32, 4
    input_size = len(filter_sizes) * n_filters          # 24

    key = jax.random.PRNGKey(0)
    ks = jax.random.split(key, 12)

    # Parameters (deterministic synthetic init, PyTorch-like uniform scales).
    emb_table = jax.random.normal(ks[0], (vocab, emb_dim), jnp.float32) * 0.1

    conv_params = []
    for i, fs in enumerate(filter_sizes):
        bound = 1.0 / (fs * emb_dim) ** 0.5
        w = jax.random.uniform(ks[1 + i], (fs, emb_dim, n_filters), jnp.float32,
                               -bound, bound)
        b = jax.random.uniform(ks[4 + i], (1, n_filters), jnp.float32, -bound, bound)
        conv_params.append((w, b))

    lstm_bound = 1.0 / hidden_size ** 0.5
    w_ih = jax.random.uniform(ks[7], (4 * hidden_size, output_size), jnp.float32,
                              -lstm_bound, lstm_bound)
    w_hh = jax.random.uniform(ks[8], (4 * hidden_size, hidden_size), jnp.float32,
                              -lstm_bound, lstm_bound)
    b_ih = jax.random.uniform(ks[9], (4 * hidden_size,), jnp.float32,
                              -lstm_bound, lstm_bound)
    b_hh = jax.random.uniform(ks[10], (4 * hidden_size,), jnp.float32,
                              -lstm_bound, lstm_bound)
    h2o_bound = 1.0 / (hidden_size + input_size) ** 0.5
    w_o = jax.random.uniform(ks[11], (output_size, hidden_size + input_size),
                             jnp.float32, -h2o_bound, h2o_bound)
    b_o = jnp.linspace(-0.05, 0.05, output_size, dtype=jnp.float32)

    lstm_params = (w_ih, w_hh, b_ih, b_hh)
    h2o_params = (w_o, b_o)

    # Deterministic input token ids.
    dialogue = jax.random.randint(jax.random.PRNGKey(42),
                                  (batch, timesteps, sent_len), 0, vocab)

    out = damic_forward(dialogue, emb_table, conv_params, lstm_params, h2o_params,
                        filter_sizes, hidden_size, output_size)
    out = jax.block_until_ready(out)

    ref = reference_forward(dialogue, emb_table, conv_params, lstm_params, h2o_params,
                            filter_sizes, hidden_size, output_size)
    ref = jax.block_until_ready(ref)

    assert out.shape == (batch, timesteps, output_size), out.shape
    # Tolerance accounts for the bf16 feed of the CNN matmul (f32 reference).
    max_err = float(jnp.max(jnp.abs(out - ref)))
    assert jnp.allclose(out, ref, rtol=1e-2, atol=1e-2), max_err

    print("KERNEL_OK")
</pallas_src>

<mosaic_0001>
module attributes {stable_mosaic.version = 11 : i64} {
  func.func @_cnn_kernel(%arg0: i32, %arg1: memref<16x16x32xbf16, #tpu.memory_space<vmem>>, %arg2: memref<32x1152xbf16, #tpu.memory_space<vmem>>, %arg3: memref<1x384xf32, #tpu.memory_space<vmem>>, %arg4: memref<384x4xf32, #tpu.memory_space<vmem>>, %arg5: memref<1x4xf32, #tpu.memory_space<vmem>>, %arg6: memref<16x4xf32, #tpu.memory_space<vmem>>) attributes {dimension_semantics = [#tpu.dimension_semantics<parallel>], iteration_bounds = array<i64: 1>, scalar_prefetch = 0 : i64, scratch_operands = 0 : i64, tpu.core_type = #tpu.core_type<tc>, window_params = [{transform_indices = @transform_0, window_bounds = array<i64: 16, 16, 32>}, {pipeline_mode = #tpu.pipeline_mode<synchronous>, transform_indices = @transform_1, window_bounds = array<i64: 32, 1152>}, {pipeline_mode = #tpu.pipeline_mode<synchronous>, transform_indices = @transform_2, window_bounds = array<i64: 1, 384>}, {pipeline_mode = #tpu.pipeline_mode<synchronous>, transform_indices = @transform_3, window_bounds = array<i64: 384, 4>}, {pipeline_mode = #tpu.pipeline_mode<synchronous>, transform_indices = @transform_4, window_bounds = array<i64: 1, 4>}, {transform_indices = @transform_5, window_bounds = array<i64: 16, 4>}]} {
    %c0 = arith.constant 0 : index
    %c0_0 = arith.constant 0 : index
    %c0_1 = arith.constant 0 : index
    %0 = vector.load %arg1[%c0, %c0_0, %c0_1] : memref<16x16x32xbf16, #tpu.memory_space<vmem>>, vector<16x16x32xbf16>
    %1 = vector.shape_cast %0 : vector<16x16x32xbf16> to vector<256x32xbf16>
    %c0_2 = arith.constant 0 : index
    %c0_3 = arith.constant 0 : index
    %2 = vector.load %arg2[%c0_2, %c0_3] : memref<32x1152xbf16, #tpu.memory_space<vmem>>, vector<32x1152xbf16>
    %cst = arith.constant dense<0.000000e+00> : vector<256x1152xf32>
    %3 = tpu.matmul %1, %2, %cst {dimension_numbers = #tpu.dot_dimension_numbers<[1], [0], [0], [1], [0, 0, 1, 1], [], []>} : vector<256x32xbf16>, vector<32x1152xbf16>, vector<256x1152xf32> -> vector<256x1152xf32>
    %4 = vector.shape_cast %3 : vector<256x1152xf32> to vector<16x16x1152xf32>
    %5 = vector.extract_strided_slice %4 {offsets = [0, 0, 0], sizes = [16, 15, 128], strides = [1, 1, 1]} : vector<16x16x1152xf32> to vector<16x15x128xf32>
    %6 = vector.extract_strided_slice %4 {offsets = [0, 1, 128], sizes = [16, 15, 128], strides = [1, 1, 1]} : vector<16x16x1152xf32> to vector<16x15x128xf32>
    %7 = arith.addf %5, %6 : vector<16x15x128xf32>
    %cst_4 = arith.constant dense<0xFF800000> : vector<16x128xf32>
    %8 = vector.multi_reduction <maximumf>, %7, %cst_4 [1] : vector<16x15x128xf32> to vector<16x128xf32>
    %9 = vector.extract_strided_slice %4 {offsets = [0, 0, 256], sizes = [16, 14, 128], strides = [1, 1, 1]} : vector<16x16x1152xf32> to vector<16x14x128xf32>
    %10 = vector.extract_strided_slice %4 {offsets = [0, 1, 384], sizes = [16, 14, 128], strides = [1, 1, 1]} : vector<16x16x1152xf32> to vector<16x14x128xf32>
    %11 = arith.addf %9, %10 : vector<16x14x128xf32>
    %12 = vector.extract_strided_slice %4 {offsets = [0, 2, 512], sizes = [16, 14, 128], strides = [1, 1, 1]} : vector<16x16x1152xf32> to vector<16x14x128xf32>
    %13 = arith.addf %11, %12 : vector<16x14x128xf32>
    %cst_5 = arith.constant dense<0xFF800000> : vector<16x128xf32>
    %14 = vector.multi_reduction <maximumf>, %13, %cst_5 [1] : vector<16x14x128xf32> to vector<16x128xf32>
    %15 = vector.extract_strided_slice %4 {offsets = [0, 0, 640], sizes = [16, 13, 128], strides = [1, 1, 1]} : vector<16x16x1152xf32> to vector<16x13x128xf32>
    %16 = vector.extract_strided_slice %4 {offsets = [0, 1, 768], sizes = [16, 13, 128], strides = [1, 1, 1]} : vector<16x16x1152xf32> to vector<16x13x128xf32>
    %17 = arith.addf %15, %16 : vector<16x13x128xf32>
    %18 = vector.extract_strided_slice %4 {offsets = [0, 2, 896], sizes = [16, 13, 128], strides = [1, 1, 1]} : vector<16x16x1152xf32> to vector<16x13x128xf32>
    %19 = arith.addf %17, %18 : vector<16x13x128xf32>
    %20 = vector.extract_strided_slice %4 {offsets = [0, 3, 1024], sizes = [16, 13, 128], strides = [1, 1, 1]} : vector<16x16x1152xf32> to vector<16x13x128xf32>
    %21 = arith.addf %19, %20 : vector<16x13x128xf32>
    %cst_6 = arith.constant dense<0xFF800000> : vector<16x128xf32>
    %22 = vector.multi_reduction <maximumf>, %21, %cst_6 [1] : vector<16x13x128xf32> to vector<16x128xf32>
    %23 = tpu.concatenate %8, %14, %22 in 1 : vector<16x128xf32>, vector<16x128xf32>, vector<16x128xf32> -> vector<16x384xf32>
    %c0_7 = arith.constant 0 : index
    %c0_8 = arith.constant 0 : index
    %24 = vector.load %arg3[%c0_7, %c0_8] : memref<1x384xf32, #tpu.memory_space<vmem>>, vector<1x384xf32>
    %25 = vector.broadcast %24 : vector<1x384xf32> to vector<16x384xf32>
    %26 = arith.addf %23, %25 : vector<16x384xf32>
    %cst_9 = arith.constant 0.000000e+00 : f32
    %27 = vector.broadcast %cst_9 : f32 to vector<16x384xf32>
    %28 = arith.maximumf %26, %27 : vector<16x384xf32>
    %c0_10 = arith.constant 0 : index
    %c0_11 = arith.constant 0 : index
    %29 = vector.load %arg4[%c0_10, %c0_11] : memref<384x4xf32, #tpu.memory_space<vmem>>, vector<384x4xf32>
    %cst_12 = arith.constant dense<0.000000e+00> : vector<16x4xf32>
    %30 = tpu.matmul %28, %29, %cst_12 {dimension_numbers = #tpu.dot_dimension_numbers<[1], [0], [0], [1], [0, 0, 1, 1], [], []>} : vector<16x384xf32>, vector<384x4xf32>, vector<16x4xf32> -> vector<16x4xf32>
    %c0_13 = arith.constant 0 : index
    %c0_14 = arith.constant 0 : index
    %31 = vector.load %arg5[%c0_13, %c0_14] : memref<1x4xf32, #tpu.memory_space<vmem>>, vector<1x4xf32>
    %32 = vector.broadcast %31 : vector<1x4xf32> to vector<16x4xf32>
    %33 = arith.addf %30, %32 : vector<16x4xf32>
    %c0_15 = arith.constant 0 : index
    %c0_16 = arith.constant 0 : index
    %34 = vector.load %arg6[%c0_15, %c0_16] : memref<16x4xf32, #tpu.memory_space<vmem>>, vector<16x4xf32>
    tpu.vector_store %arg6[%c0_15, %c0_16], %33 {strides = array<i32>} : memref<16x4xf32, #tpu.memory_space<vmem>>, vector<16x4xf32>,
    return
  }
  func.func @transform_0(%arg0: i32) -> (i32, i32, i32) {
    %c0_i32 = arith.constant 0 : i32
    %c0_i32_0 = arith.constant 0 : i32
    %c0_i32_1 = arith.constant 0 : i32
    return %arg0, %c0_i32, %c0_i32_0 : i32, i32, i32
  }
  func.func @transform_1(%arg0: i32) -> (i32, i32) {
    %c0_i32 = arith.constant 0 : i32
    %c0_i32_0 = arith.constant 0 : i32
    %c0_i32_1 = arith.constant 0 : i32
    return %c0_i32, %c0_i32_0 : i32, i32
  }
  func.func @transform_2(%arg0: i32) -> (i32, i32) {
    %c0_i32 = arith.constant 0 : i32
    %c0_i32_0 = arith.constant 0 : i32
    %c0_i32_1 = arith.constant 0 : i32
    return %c0_i32, %c0_i32_0 : i32, i32
  }
  func.func @transform_3(%arg0: i32) -> (i32, i32) {
    %c0_i32 = arith.constant 0 : i32
    %c0_i32_0 = arith.constant 0 : i32
    %c0_i32_1 = arith.constant 0 : i32
    return %c0_i32, %c0_i32_0 : i32, i32
  }
  func.func @transform_4(%arg0: i32) -> (i32, i32) {
    %c0_i32 = arith.constant 0 : i32
    %c0_i32_0 = arith.constant 0 : i32
    %c0_i32_1 = arith.constant 0 : i32
    return %c0_i32, %c0_i32_0 : i32, i32
  }
  func.func @transform_5(%arg0: i32) -> (i32, i32) {
    %c0_i32 = arith.constant 0 : i32
    %c0_i32_0 = arith.constant 0 : i32
    return %arg0, %c0_i32 : i32, i32
  }
}

</mosaic_0001>

<llo_original>
// kernel: tpu_custom_call.1
$region0: #{tpu_custom_call.1}
  #allocation0 [shape = 'u32[]', space=smem, size = 0x4, offset = 0x4, fixed_abs, tag = 'smem constant byte address 0x4 - core index']
  #allocation1 [shape = 'u32[144,128]{1,0:T(1,128)}', space=vmem, size = 0x12000, scoped, tag = 'internal scratch']
  %s0 = inlined_call_operand.vmem [shape: bf16[16,16,32], index: 0, kind: input, shape index: {}]
  %s1 = inlined_call_operand.vmem [shape: bf16[32,1152], index: 1, kind: input, shape index: {}]
  %s2 = inlined_call_operand.vmem [shape: f32[1,384], index: 2, kind: input, shape index: {}]
  %s3 = inlined_call_operand.vmem [shape: f32[384,4], index: 3, kind: input, shape index: {}]
  %s4 = inlined_call_operand.vmem [shape: f32[1,4], index: 4, kind: input, shape index: {}]
  %s5 = inlined_call_operand.vmem [shape: f32[16,4], index: 5, kind: output, shape index: {}]
  %s6 = sld [smem:[#allocation0]]
  $region30: #{tpu_custom_call.1} parent=0
    _
  %s8 = ssub.s32 1, %s6
  %s9 = scalar_select 0, %s8, %s6
  // Predicated region
  $region2: #{tpu_custom_call.1} parent=0 // pred_check
    _
  $region3: #{tpu_custom_call.1} parent=0 // pred_check_branch
    %11 = sbr.rel (0) target = $region5
  $region4: #{tpu_custom_call.1} parent=0 // pred_region
    _
  $region5: #{tpu_custom_call.1} parent=0 // pred_fallthru
    _
  // Predicated region
  $region6: #{tpu_custom_call.1} parent=0 // pred_check
    _
  $region7: #{tpu_custom_call.1} parent=0 // pred_check_branch
    %13 = sbr.rel (0) target = $region9
  $region8: #{tpu_custom_call.1} parent=0 // pred_region
    _
  $region9: #{tpu_custom_call.1} parent=0 // pred_fallthru
    _
  // Predicated region
  $region10: #{tpu_custom_call.1} parent=0 // pred_check
    _
  $region11: #{tpu_custom_call.1} parent=0 // pred_check_branch
    %15 = sbr.rel (0) target = $region13
  $region12: #{tpu_custom_call.1} parent=0 // pred_region
    _
  $region13: #{tpu_custom_call.1} parent=0 // pred_fallthru
    _
  // Predicated region
  $region14: #{tpu_custom_call.1} parent=0 // pred_check
    _
  $region15: #{tpu_custom_call.1} parent=0 // pred_check_branch
    %17 = sbr.rel (0) target = $region17
  $region16: #{tpu_custom_call.1} parent=0 // pred_region
    _
  $region17: #{tpu_custom_call.1} parent=0 // pred_fallthru
    _
  // Predicated region
  $region18: #{tpu_custom_call.1} parent=0 // pred_check
    _
  $region19: #{tpu_custom_call.1} parent=0 // pred_check_branch
    %19 = sbr.rel (0) target = $region21
  $region20: #{tpu_custom_call.1} parent=0 // pred_region
    _
  $region21: #{tpu_custom_call.1} parent=0 // pred_fallthru
    _
  %v21 = vld [vmem:[%s0] sm:$0xf]
  %v22 = vld [vmem:[%s0 + $0x4] sm:$0xf]
  %v23 = vld [vmem:[%s0 + $0x8] sm:$0xf]
  %v24 = vld [vmem:[%s0 + $0xc] sm:$0xf]
  %v25 = vld [vmem:[%s0 + $0x10] sm:$0xf]
  %v26 = vld [vmem:[%s0 + $0x14] sm:$0xf]
  %v27 = vld [vmem:[%s0 + $0x18] sm:$0xf]
  %v28 = vld [vmem:[%s0 + $0x1c] sm:$0xf]
  %v29 = vld [vmem:[%s0 + $0x20] sm:$0xf]
  %v30 = vld [vmem:[%s0 + $0x24] sm:$0xf]
  %v31 = vld [vmem:[%s0 + $0x28] sm:$0xf]
  %v32 = vld [vmem:[%s0 + $0x2c] sm:$0xf]
  %v33 = vld [vmem:[%s0 + $0x30] sm:$0xf]
  %v34 = vld [vmem:[%s0 + $0x34] sm:$0xf]
  %v35 = vld [vmem:[%s0 + $0x38] sm:$0xf]
  %v36 = vld [vmem:[%s0 + $0x3c] sm:$0xf]
  %v37 = vld [vmem:[%s0 + $0x40] sm:$0xf]
  %v38 = vld [vmem:[%s0 + $0x44] sm:$0xf]
  %v39 = vld [vmem:[%s0 + $0x48] sm:$0xf]
  %v40 = vld [vmem:[%s0 + $0x4c] sm:$0xf]
  %v41 = vld [vmem:[%s0 + $0x50] sm:$0xf]
  %v42 = vld [vmem:[%s0 + $0x54] sm:$0xf]
  %v43 = vld [vmem:[%s0 + $0x58] sm:$0xf]
  %v44 = vld [vmem:[%s0 + $0x5c] sm:$0xf]
  %v45 = vld [vmem:[%s0 + $0x60] sm:$0xf]
  %v46 = vld [vmem:[%s0 + $0x64] sm:$0xf]
  %v47 = vld [vmem:[%s0 + $0x68] sm:$0xf]
  %v48 = vld [vmem:[%s0 + $0x6c] sm:$0xf]
  %v49 = vld [vmem:[%s0 + $0x70] sm:$0xf]
  %v50 = vld [vmem:[%s0 + $0x74] sm:$0xf]
  %v51 = vld [vmem:[%s0 + $0x78] sm:$0xf]
  %v52 = vld [vmem:[%s0 + $0x7c] sm:$0xf]
  %v53 = vld [vmem:[%s1] sm:$0xff]
  %v54 = vld [vmem:[%s1 + $0x8] sm:$0xff]
  %v55 = vld [vmem:[%s1 + $0x10] sm:$0xff]
  %v56 = vld [vmem:[%s1 + $0x18] sm:$0xff]
  %v57 = vld [vmem:[%s1 + $0x20] sm:$0xf]
  %v58 = vld [vmem:[%s1 + $0x24] sm:$0xff]
  %v59 = vld [vmem:[%s1 + $0x2c] sm:$0xff]
  %v60 = vld [vmem:[%s1 + $0x34] sm:$0xff]
  %v61 = vld [vmem:[%s1 + $0x3c] sm:$0xff]
  %v62 = vld [vmem:[%s1 + $0x44] sm:$0xf]
  %v63 = vld [vmem:[%s1 + $0x48] sm:$0xff]
  %v64 = vld [vmem:[%s1 + $0x50] sm:$0xff]
  %v65 = vld [vmem:[%s1 + $0x58] sm:$0xff]
  %v66 = vld [vmem:[%s1 + $0x60] sm:$0xff]
  %v67 = vld [vmem:[%s1 + $0x68] sm:$0xf]
  %v68 = vld [vmem:[%s1 + $0x6c] sm:$0xff]
  %v69 = vld [vmem:[%s1 + $0x74] sm:$0xff]
  %v70 = vld [vmem:[%s1 + $0x7c] sm:$0xff]
  %v71 = vld [vmem:[%s1 + $0x84] sm:$0xff]
  %v72 = vld [vmem:[%s1 + $0x8c] sm:$0xf]
  %v105 = vunpack.c.l.b16 %v21
  %v106 = vunpack.c.l.b16 %v22
  %v107 = vunpack.c.l.b16 %v23
  %v108 = vunpack.c.l.b16 %v24
  %v109 = vunpack.c.l.b16 %v25
  %v110 = vunpack.c.l.b16 %v26
  %v111 = vunpack.c.l.b16 %v27
  %v112 = vunpack.c.l.b16 %v28
  %v113 = vunpack.c.l.b16 %v29
  %v114 = vunpack.c.l.b16 %v30
  %v115 = vunpack.c.l.b16 %v31
  %v116 = vunpack.c.l.b16 %v32
  %v117 = vunpack.c.l.b16 %v33
  %v118 = vunpack.c.l.b16 %v34
  %v119 = vunpack.c.l.b16 %v35
  %v120 = vunpack.c.l.b16 %v36
  %v121 = vunpack.c.l.b16 %v37
  %v122 = vunpack.c.l.b16 %v38
  %v123 = vunpack.c.l.b16 %v39
  %v124 = vunpack.c.l.b16 %v40
  %v125 = vunpack.c.l.b16 %v41
  %v126 = vunpack.c.l.b16 %v42
  %v127 = vunpack.c.l.b16 %v43
  %v128 = vunpack.c.l.b16 %v44
  %v129 = vunpack.c.l.b16 %v45
  %v130 = vunpack.c.l.b16 %v46
  %v131 = vunpack.c.l.b16 %v47
  %v132 = vunpack.c.l.b16 %v48
  %v133 = vunpack.c.l.b16 %v49
  %v134 = vunpack.c.l.b16 %v50
  %v135 = vunpack.c.l.b16 %v51
  %v136 = vunpack.c.l.b16 %v52
  %v137 = vpack.c.b16 %v106, %v105
  %v138 = vpack.c.b16 %v108, %v107
  %v139 = vpack.c.b16 %v110, %v109
  %v140 = vpack.c.b16 %v112, %v111
  %v141 = vpack.c.b16 %v114, %v113
  %v142 = vpack.c.b16 %v116, %v115
  %v143 = vpack.c.b16 %v118, %v117
  %v144 = vpack.c.b16 %v120, %v119
  %v145 = vpack.c.b16 %v122, %v121
  %v146 = vpack.c.b16 %v124, %v123
  %v147 = vpack.c.b16 %v126, %v125
  %v148 = vpack.c.b16 %v128, %v127
  %v149 = vpack.c.b16 %v130, %v129
  %v150 = vpack.c.b16 %v132, %v131
  %v151 = vpack.c.b16 %v134, %v133
  %v152 = vpack.c.b16 %v136, %v135
  %v173 = vunpack.c.l.b16 %v53
  %v174 = vunpack.c.h.b16 %v53
  %v175 = vunpack.c.l.b16 %v54
  %v176 = vunpack.c.h.b16 %v54
  %v177 = vunpack.c.l.b16 %v55
  %v178 = vunpack.c.h.b16 %v55
  %v179 = vunpack.c.l.b16 %v56
  %v180 = vunpack.c.h.b16 %v56
  %v181 = vunpack.c.l.b16 %v57
  %v182 = vunpack.c.l.b16 %v58
  %v183 = vunpack.c.h.b16 %v58
  %v184 = vunpack.c.l.b16 %v59
  %v185 = vunpack.c.h.b16 %v59
  %v186 = vunpack.c.l.b16 %v60
  %v187 = vunpack.c.h.b16 %v60
  %v188 = vunpack.c.l.b16 %v61
  %v189 = vunpack.c.h.b16 %v61
  %v190 = vunpack.c.l.b16 %v62
  %v191 = vunpack.c.l.b16 %v63
  %v192 = vunpack.c.h.b16 %v63
  %v193 = vunpack.c.l.b16 %v64
  %v194 = vunpack.c.h.b16 %v64
  %v195 = vunpack.c.l.b16 %v65
  %v196 = vunpack.c.h.b16 %v65
  %v197 = vunpack.c.l.b16 %v66
  %v198 = vunpack.c.h.b16 %v66
  %v199 = vunpack.c.l.b16 %v67
  %v200 = vunpack.c.l.b16 %v68
  %v201 = vunpack.c.h.b16 %v68
  %v202 = vunpack.c.l.b16 %v69
  %v203 = vunpack.c.h.b16 %v69
  %v204 = vunpack.c.l.b16 %v70
  %v205 = vunpack.c.h.b16 %v70
  %v206 = vunpack.c.l.b16 %v71
  %v207 = vunpack.c.h.b16 %v71
  %v208 = vunpack.c.l.b16 %v72
  %v209 = vpack.c.b16 %v182, %v173
  %v210 = vpack.c.b16 %v183, %v174
  %v211 = vpack.c.b16 %v184, %v175
  %v212 = vpack.c.b16 %v185, %v176
  %v213 = vpack.c.b16 %v186, %v177
  %v214 = vpack.c.b16 %v187, %v178
  %v215 = vpack.c.b16 %v188, %v179
  %v216 = vpack.c.b16 %v189, %v180
  %v217 = vpack.c.b16 %v190, %v181
  %v218 = vpack.c.b16 %v200, %v191
  %v219 = vpack.c.b16 %v201, %v192
  %v220 = vpack.c.b16 %v202, %v193
  %v221 = vpack.c.b16 %v203, %v194
  %v222 = vpack.c.b16 %v204, %v195
  %v223 = vpack.c.b16 %v205, %v196
  %v224 = vpack.c.b16 %v206, %v197
  %v225 = vpack.c.b16 %v207, %v198
  %v226 = vpack.c.b16 %v208, %v199
  %vm245 = vcmask 261120
  %v247 = vsel %vm245, %v137, 0
  %v250 = vsel %vm245, %v138, 0
  %v253 = vsel %vm245, %v139, 0
  %v256 = vsel %vm245, %v140, 0
  %v259 = vsel %vm245, %v141, 0
  %v262 = vsel %vm245, %v142, 0
  %v265 = vsel %vm245, %v143, 0
  %v268 = vsel %vm245, %v144, 0
  %v271 = vsel %vm245, %v145, 0
  %v274 = vsel %vm245, %v146, 0
  %v277 = vsel %vm245, %v147, 0
  %v280 = vsel %vm245, %v148, 0
  %v283 = vsel %vm245, %v149, 0
  %v286 = vsel %vm245, %v150, 0
  %v289 = vsel %vm245, %v151, 0
  %v292 = vsel %vm245, %v152, 0
  %294 = vmatprep.subr.bf16.mxu0 %v210
  %295 = vmatpush1.bf16.msra.mxu0 %v209
  %296 = vmatprep.subr.bf16.mxu0 %v219
  %297 = vmatpush1.bf16.msra.mxu0 %v218
  %298 = vmatprep.subr.bf16.mxu0 0
  %299 = vmatpush1.bf16.msra.mxu0 0
  %300 = vmatprep.subr.bf16.mxu0 0
  %301 = vmatpush1.bf16.msra.mxu0 0
  %302 = vmatprep.subr.bf16.mxu0 0
  %303 = vmatpush1.bf16.msra.mxu0 0
  %304 = vmatprep.subr.bf16.mxu0 0
  %305 = vmatpush1.bf16.msra.mxu0 0
  %306 = vmatprep.subr.bf16.mxu0 0
  %307 = vmatpush1.bf16.msra.mxu0 0
  %308 = vmatprep.subr.bf16.mxu0 0
  %309 = vmatpush1.bf16.msra.mxu0 0
  %310 = vmatprep.subr.bf16.mxu0 0
  %311 = vmatpush1.bf16.msra.mxu0 0
  %312 = vmatprep.subr.bf16.mxu0 0
  %313 = vmatpush1.bf16.msra.mxu0 0
  %314 = vmatprep.subr.bf16.mxu0 0
  %315 = vmatpush1.bf16.msra.mxu0 0
  %316 = vmatprep.subr.bf16.mxu0 0
  %317 = vmatpush1.bf16.msra.mxu0 0
  %318 = vmatprep.subr.bf16.mxu0 0
  %319 = vmatpush1.bf16.msra.mxu0 0
  %320 = vmatprep.subr.bf16.mxu0 0
  %321 = vmatpush1.bf16.msra.mxu0 0
  %322 = vmatprep.subr.bf16.mxu0 0
  %323 = vmatpush1.bf16.msra.mxu0 0
  %324 = vmatprep.subr.bf16.mxu0 0
  %325 = vmatpush1.bf16.msra.mxu0 0
  %326 = vmatprep.mubr.bf16.mxu0 0
  %327 = vmatmul.mubr.bf16.gmra.mrb[0].mxu0 %v247
  %v328 = vpop.f32.mrb[0].mxu0
  %v329 = vadd.f32 0.0, %v328
  %v330 = vpop.f32.mrb[0].mxu0
  %v331 = vadd.f32 0.0, %v330
  %v332 = vpop.f32.mrb[0].mxu0
  %v333 = vadd.f32 0.0, %v332
  %v334 = vpop.f32.mrb[0].mxu0
  %v335 = vadd.f32 0.0, %v334
  %336 = vmatprep.mubr.bf16.mxu0 0
  %337 = vmatmul.mubr.bf16.gmra.mrb[0].mxu0 %v250
  %v338 = vpop.f32.mrb[0].mxu0
  %v339 = vadd.f32 0.0, %v338
  %v340 = vpop.f32.mrb[0].mxu0
  %v341 = vadd.f32 0.0, %v340
  %v342 = vpop.f32.mrb[0].mxu0
  %v343 = vadd.f32 0.0, %v342
  %v344 = vpop.f32.mrb[0].mxu0
  %v345 = vadd.f32 0.0, %v344
  %346 = vmatprep.mubr.bf16.mxu0 0
  %347 = vmatmul.mubr.bf16.gmra.mrb[0].mxu0 %v253
  %v348 = vpop.f32.mrb[0].mxu0
  %v349 = vadd.f32 0.0, %v348
  %v350 = vpop.f32.mrb[0].mxu0
  %v351 = vadd.f32 0.0, %v350
  %v352 = vpop.f32.mrb[0].mxu0
  %v353 = vadd.f32 0.0, %v352
  %v354 = vpop.f32.mrb[0].mxu0
  %v355 = vadd.f32 0.0, %v354
  %356 = vmatprep.mubr.bf16.mxu0 0
  %357 = vmatmul.mubr.bf16.gmra.mrb[0].mxu0 %v256
  %v358 = vpop.f32.mrb[0].mxu0
  %v359 = vadd.f32 0.0, %v358
  %v360 = vpop.f32.mrb[0].mxu0
  %v361 = vadd.f32 0.0, %v360
  %v362 = vpop.f32.mrb[0].mxu0
  %v363 = vadd.f32 0.0, %v362
  %v364 = vpop.f32.mrb[0].mxu0
  %v365 = vadd.f32 0.0, %v364
  %366 = vmatprep.mubr.bf16.mxu0 0
  %367 = vmatmul.mubr.bf16.gmra.mrb[0].mxu0 %v259
  %v368 = vpop.f32.mrb[0].mxu0
  %v369 = vadd.f32 0.0, %v368
  %v370 = vpop.f32.mrb[0].mxu0
  %v371 = vadd.f32 0.0, %v370
  %v372 = vpop.f32.mrb[0].mxu0
  %v373 = vadd.f32 0.0, %v372
  %v374 = vpop.f32.mrb[0].mxu0
  %v375 = vadd.f32 0.0, %v374
  %376 = vmatprep.mubr.bf16.mxu0 0
  %377 = vmatmul.mubr.bf16.gmra.mrb[0].mxu0 %v262
  %v378 = vpop.f32.mrb[0].mxu0
  %v379 = vadd.f32 0.0, %v378
  %v380 = vpop.f32.mrb[0].mxu0
  %v381 = vadd.f32 0.0, %v380
  %v382 = vpop.f32.mrb[0].mxu0
  %v383 = vadd.f32 0.0, %v382
  %v384 = vpop.f32.mrb[0].mxu0
  %v385 = vadd.f32 0.0, %v384
  %386 = vmatprep.mubr.bf16.mxu0 0
  %387 = vmatmul.mubr.bf16.gmra.mrb[0].mxu0 %v265
  %v388 = vpop.f32.mrb[0].mxu0
  %v389 = vadd.f32 0.0, %v388
  %v390 = vpop.f32.mrb[0].mxu0
  %v391 = vadd.f32 0.0, %v390
  %v392 = vpop.f32.mrb[0].mxu0
  %v393 = vadd.f32 0.0, %v392
  %v394 = vpop.f32.mrb[0].mxu0
  %v395 = vadd.f32 0.0, %v394
  %396 = vmatprep.mubr.bf16.mxu0 0
  %397 = vmatmul.mubr.bf16.gmra.mrb[0].mxu0 %v268
  %v398 = vpop.f32.mrb[0].mxu0
  %v399 = vadd.f32 0.0, %v398
  %v400 = vpop.f32.mrb[0].mxu0
  %v401 = vadd.f32 0.0, %v400
  %v402 = vpop.f32.mrb[0].mxu0
  %v403 = vadd.f32 0.0, %v402
  %v404 = vpop.f32.mrb[0].mxu0
  %v405 = vadd.f32 0.0, %v404
  %406 = vmatprep.mubr.bf16.mxu0 0
  %407 = vmatmul.mubr.bf16.gmra.mrb[0].mxu0 %v271
  %v408 = vpop.f32.mrb[0].mxu0
  %v409 = vadd.f32 0.0, %v408
  %v410 = vpop.f32.mrb[0].mxu0
  %v411 = vadd.f32 0.0, %v410
  %v412 = vpop.f32.mrb[0].mxu0
  %v413 = vadd.f32 0.0, %v412
  %v414 = vpop.f32.mrb[0].mxu0
  %v415 = vadd.f32 0.0, %v414
  %416 = vmatprep.mubr.bf16.mxu0 0
  %417 = vmatmul.mubr.bf16.gmra.mrb[0].mxu0 %v274
  %v418 = vpop.f32.mrb[0].mxu0
  %v419 = vadd.f32 0.0, %v418
  %v420 = vpop.f32.mrb[0].mxu0
  %v421 = vadd.f32 0.0, %v420
  %v422 = vpop.f32.mrb[0].mxu0
  %v423 = vadd.f32 0.0, %v422
  %v424 = vpop.f32.mrb[0].mxu0
  %v425 = vadd.f32 0.0, %v424
  %426 = vmatprep.mubr.bf16.mxu0 0
  %427 = vmatmul.mubr.bf16.gmra.mrb[0].mxu0 %v277
  %v428 = vpop.f32.mrb[0].mxu0
  %v429 = vadd.f32 0.0, %v428
  %v430 = vpop.f32.mrb[0].mxu0
  %v431 = vadd.f32 0.0, %v430
  %v432 = vpop.f32.mrb[0].mxu0
  %v433 = vadd.f32 0.0, %v432
  %v434 = vpop.f32.mrb[0].mxu0
  %v435 = vadd.f32 0.0, %v434
  %436 = vmatprep.mubr.bf16.mxu0 0
  %437 = vmatmul.mubr.bf16.gmra.mrb[0].mxu0 %v280
  %v438 = vpop.f32.mrb[0].mxu0
  %v439 = vadd.f32 0.0, %v438
  %v440 = vpop.f32.mrb[0].mxu0
  %v441 = vadd.f32 0.0, %v440
  %v442 = vpop.f32.mrb[0].mxu0
  %v443 = vadd.f32 0.0, %v442
  %v444 = vpop.f32.mrb[0].mxu0
  %v445 = vadd.f32 0.0, %v444
  %446 = vmatprep.mubr.bf16.mxu0 0
  %447 = vmatmul.mubr.bf16.gmra.mrb[0].mxu0 %v283
  %v448 = vpop.f32.mrb[0].mxu0
  %v449 = vadd.f32 0.0, %v448
  %v450 = vpop.f32.mrb[0].mxu0
  %v451 = vadd.f32 0.0, %v450
  %v452 = vpop.f32.mrb[0].mxu0
  %v453 = vadd.f32 0.0, %v452
  %v454 = vpop.f32.mrb[0].mxu0
  %v455 = vadd.f32 0.0, %v454
  %456 = vmatprep.mubr.bf16.mxu0 0
  %457 = vmatmul.mubr.bf16.gmra.mrb[0].mxu0 %v286
  %v458 = vpop.f32.mrb[0].mxu0
  %v459 = vadd.f32 0.0, %v458
  %v460 = vpop.f32.mrb[0].mxu0
  %v461 = vadd.f32 0.0, %v460
  %v462 = vpop.f32.mrb[0].mxu0
  %v463 = vadd.f32 0.0, %v462
  %v464 = vpop.f32.mrb[0].mxu0
  %v465 = vadd.f32 0.0, %v464
  %466 = vmatprep.mubr.bf16.mxu0 0
  %467 = vmatmul.mubr.bf16.gmra.mrb[0].mxu0 %v289
  %v468 = vpop.f32.mrb[0].mxu0
  %v469 = vadd.f32 0.0, %v468
  %v470 = vpop.f32.mrb[0].mxu0
  %v471 = vadd.f32 0.0, %v470
  %v472 = vpop.f32.mrb[0].mxu0
  %v473 = vadd.f32 0.0, %v472
  %v474 = vpop.f32.mrb[0].mxu0
  %v475 = vadd.f32 0.0, %v474
  %476 = vmatprep.mubr.bf16.mxu0 0
  %477 = vmatmul.mubr.bf16.gmra.mrb[0].mxu0 %v292
  %v478 = vpop.f32.mrb[0].mxu0
  %v479 = vadd.f32 0.0, %v478
  %v480 = vpop.f32.mrb[0].mxu0
  %v481 = vadd.f32 0.0, %v480
  %v482 = vpop.f32.mrb[0].mxu0
  %v483 = vadd.f32 0.0, %v482
  %v484 = vpop.f32.mrb[0].mxu0
  %v485 = vadd.f32 0.0, %v484
  %486 = vdwg.mxu0
  %487 = vmatprep.subr.bf16.mxu0 %v212
  %488 = vmatpush1.bf16.msra.mxu0 %v211
  %489 = vmatprep.subr.bf16.mxu0 %v221
  %490 = vmatpush1.bf16.msra.mxu0 %v220
  %491 = vmatprep.subr.bf16.mxu0 0
  %492 = vmatpush1.bf16.msra.mxu0 0
  %493 = vmatprep.subr.bf16.mxu0 0
  %494 = vmatpush1.bf16.msra.mxu0 0
  %495 = vmatprep.subr.bf16.mxu0 0
  %496 = vmatpush1.bf16.msra.mxu0 0
  %497 = vmatprep.subr.bf16.mxu0 0
  %498 = vmatpush1.bf16.msra.mxu0 0
  %499 = vmatprep.subr.bf16.mxu0 0
  %500 = vmatpush1.bf16.msra.mxu0 0
  %501 = vmatprep.subr.bf16.mxu0 0
  %502 = vmatpush1.bf16.msra.mxu0 0
  %503 = vmatprep.subr.bf16.mxu0 0
  %504 = vmatpush1.bf16.msra.mxu0 0
  %505 = vmatprep.subr.bf16.mxu0 0
  %506 = vmatpush1.bf16.msra.mxu0 0
  %507 = vmatprep.subr.bf16.mxu0 0
  %508 = vmatpush1.bf16.msra.mxu0 0
  %509 = vmatprep.subr.bf16.mxu0 0
  %510 = vmatpush1.bf16.msra.mxu0 0
  %511 = vmatprep.subr.bf16.mxu0 0
  %512 = vmatpush1.bf16.msra.mxu0 0
  %513 = vmatprep.subr.bf16.mxu0 0
  %514 = vmatpush1.bf16.msra.mxu0 0
  %515 = vmatprep.subr.bf16.mxu0 0
  %516 = vmatpush1.bf16.msra.mxu0 0
  %517 = vmatprep.subr.bf16.mxu0 0
  %518 = vmatpush1.bf16.msra.mxu0 0
  %519 = vmatprep.mubr.bf16.mxu0 0
  %520 = vmatmul.mubr.bf16.gmra.mrb[0].mxu0 %v247
  %v521 = vpop.f32.mrb[0].mxu0
  %v522 = vadd.f32 0.0, %v521
  %v523 = vpop.f32.mrb[0].mxu0
  %v524 = vadd.f32 0.0, %v523
  %v525 = vpop.f32.mrb[0].mxu0
  %v526 = vadd.f32 0.0, %v525
  %v527 = vpop.f32.mrb[0].mxu0
  %v528 = vadd.f32 0.0, %v527
  %529 = vmatprep.mubr.bf16.mxu0 0
  %530 = vmatmul.mubr.bf16.gmra.mrb[0].mxu0 %v250
  %v531 = vpop.f32.mrb[0].mxu0
  %v532 = vadd.f32 0.0, %v531
  %v533 = vpop.f32.mrb[0].mxu0
  %v534 = vadd.f32 0.0, %v533
  %v535 = vpop.f32.mrb[0].mxu0
  %v536 = vadd.f32 0.0, %v535
  %v537 = vpop.f32.mrb[0].mxu0
  %v538 = vadd.f32 0.0, %v537
  %539 = vmatprep.mubr.bf16.mxu0 0
  %540 = vmatmul.mubr.bf16.gmra.mrb[0].mxu0 %v253
  %v541 = vpop.f32.mrb[0].mxu0
  %v542 = vadd.f32 0.0, %v541
  %v543 = vpop.f32.mrb[0].mxu0
  %v544 = vadd.f32 0.0, %v543
  %v545 = vpop.f32.mrb[0].mxu0
  %v546 = vadd.f32 0.0, %v545
  %v547 = vpop.f32.mrb[0].mxu0
  %v548 = vadd.f32 0.0, %v547
  %549 = vmatprep.mubr.bf16.mxu0 0
  %550 = vmatmul.mubr.bf16.gmra.mrb[0].mxu0 %v256
  %v551 = vpop.f32.mrb[0].mxu0
  %v552 = vadd.f32 0.0, %v551
  %v553 = vpop.f32.mrb[0].mxu0
  %v554 = vadd.f32 0.0, %v553
  %v555 = vpop.f32.mrb[0].mxu0
  %v556 = vadd.f32 0.0, %v555
  %v557 = vpop.f32.mrb[0].mxu0
  %v558 = vadd.f32 0.0, %v557
  %559 = vmatprep.mubr.bf16.mxu0 0
  %560 = vmatmul.mubr.bf16.gmra.mrb[0].mxu0 %v259
  %v561 = vpop.f32.mrb[0].mxu0
  %v562 = vadd.f32 0.0, %v561
  %v563 = vpop.f32.mrb[0].mxu0
  %v564 = vadd.f32 0.0, %v563
  %v565 = vpop.f32.mrb[0].mxu0
  %v566 = vadd.f32 0.0, %v565
  %v567 = vpop.f32.mrb[0].mxu0
  %v568 = vadd.f32 0.0, %v567
  %569 = vmatprep.mubr.bf16.mxu0 0
  %570 = vmatmul.mubr.bf16.gmra.mrb[0].mxu0 %v262
  %v571 = vpop.f32.mrb[0].mxu0
  %v572 = vadd.f32 0.0, %v571
  %v573 = vpop.f32.mrb[0].mxu0
  %v574 = vadd.f32 0.0, %v573
  %v575 = vpop.f32.mrb[0].mxu0
  %v576 = vadd.f32 0.0, %v575
  %v577 = vpop.f32.mrb[0].mxu0
  %v578 = vadd.f32 0.0, %v577
  %579 = vmatprep.mubr.bf16.mxu0 0
  %580 = vmatmul.mubr.bf16.gmra.mrb[0].mxu0 %v265
  %v581 = vpop.f32.mrb[0].mxu0
  %v582 = vadd.f32 0.0, %v581
  %v583 = vpop.f32.mrb[0].mxu0
  %v584 = vadd.f32 0.0, %v583
  %v585 = vpop.f32.mrb[0].mxu0
  %v586 = vadd.f32 0.0, %v585
  %v587 = vpop.f32.mrb[0].mxu0
  %v588 = vadd.f32 0.0, %v587
  %589 = vmatprep.mubr.bf16.mxu0 0
  %590 = vmatmul.mubr.bf16.gmra.mrb[0].mxu0 %v268
  %v591 = vpop.f32.mrb[0].mxu0
  %v592 = vadd.f32 0.0, %v591
  %v593 = vpop.f32.mrb[0].mxu0
  %v594 = vadd.f32 0.0, %v593
  %v595 = vpop.f32.mrb[0].mxu0
  %v596 = vadd.f32 0.0, %v595
  %v597 = vpop.f32.mrb[0].mxu0
  %v598 = vadd.f32 0.0, %v597
  %599 = vmatprep.mubr.bf16.mxu0 0
  %600 = vmatmul.mubr.bf16.gmra.mrb[0].mxu0 %v271
  %v601 = vpop.f32.mrb[0].mxu0
  %v602 = vadd.f32 0.0, %v601
  %v603 = vpop.f32.mrb[0].mxu0
  %v604 = vadd.f32 0.0, %v603
  %v605 = vpop.f32.mrb[0].mxu0
  %v606 = vadd.f32 0.0, %v605
  %v607 = vpop.f32.mrb[0].mxu0
  %v608 = vadd.f32 0.0, %v607
  %609 = vmatprep.mubr.bf16.mxu0 0
  %610 = vmatmul.mubr.bf16.gmra.mrb[0].mxu0 %v274
  %v611 = vpop.f32.mrb[0].mxu0
  %v612 = vadd.f32 0.0, %v611
  %v613 = vpop.f32.mrb[0].mxu0
  %v614 = vadd.f32 0.0, %v613
  %v615 = vpop.f32.mrb[0].mxu0
  %v616 = vadd.f32 0.0, %v615
  %v617 = vpop.f32.mrb[0].mxu0
  %v618 = vadd.f32 0.0, %v617
  %619 = vmatprep.mubr.bf16.mxu0 0
  %620 = vmatmul.mubr.bf16.gmra.mrb[0].mxu0 %v277
  %v621 = vpop.f32.mrb[0].mxu0
  %v622 = vadd.f32 0.0, %v621
  %v623 = vpop.f32.mrb[0].mxu0
  %v624 = vadd.f32 0.0, %v623
  %v625 = vpop.f32.mrb[0].mxu0
  %v626 = vadd.f32 0.0, %v625
  %v627 = vpop.f32.mrb[0].mxu0
  %v628 = vadd.f32 0.0, %v627
  %629 = vmatprep.mubr.bf16.mxu0 0
  %630 = vmatmul.mubr.bf16.gmra.mrb[0].mxu0 %v280
  %v631 = vpop.f32.mrb[0].mxu0
  %v632 = vadd.f32 0.0, %v631
  %v633 = vpop.f32.mrb[0].mxu0
  %v634 = vadd.f32 0.0, %v633
  %v635 = vpop.f32.mrb[0].mxu0
  %v636 = vadd.f32 0.0, %v635
  %v637 = vpop.f32.mrb[0].mxu0
  %v638 = vadd.f32 0.0, %v637
  %639 = vmatprep.mubr.bf16.mxu0 0
  %640 = vmatmul.mubr.bf16.gmra.mrb[0].mxu0 %v283
  %v641 = vpop.f32.mrb[0].mxu0
  %v642 = vadd.f32 0.0, %v641
  %v643 = vpop.f32.mrb[0].mxu0
  %v644 = vadd.f32 0.0, %v643
  %v645 = vpop.f32.mrb[0].mxu0
  %v646 = vadd.f32 0.0, %v645
  %v647 = vpop.f32.mrb[0].mxu0
  %v648 = vadd.f32 0.0, %v647
  %649 = vmatprep.mubr.bf16.mxu0 0
  %650 = vmatmul.mubr.bf16.gmra.mrb[0].mxu0 %v286
  %v651 = vpop.f32.mrb[0].mxu0
  %v652 = vadd.f32 0.0, %v651
  %v653 = vpop.f32.mrb[0].mxu0
  %v654 = vadd.f32 0.0, %v653
  %v655 = vpop.f32.mrb[0].mxu0
  %v656 = vadd.f32 0.0, %v655
  %v657 = vpop.f32.mrb[0].mxu0
  %v658 = vadd.f32 0.0, %v657
  %659 = vmatprep.mubr.bf16.mxu0 0
  %660 = vmatmul.mubr.bf16.gmra.mrb[0].mxu0 %v289
  %v661 = vpop.f32.mrb[0].mxu0
  %v662 = vadd.f32 0.0, %v661
  %v663 = vpop.f32.mrb[0].mxu0
  %v664 = vadd.f32 0.0, %v663
  %v665 = vpop.f32.mrb[0].mxu0
  %v666 = vadd.f32 0.0, %v665
  %v667 = vpop.f32.mrb[0].mxu0
  %v668 = vadd.f32 0.0, %v667
  %669 = vmatprep.mubr.bf16.mxu0 0
  %670 = vmatmul.mubr.bf16.gmra.mrb[0].mxu0 %v292
  %v671 = vpop.f32.mrb[0].mxu0
  %v672 = vadd.f32 0.0, %v671
  %v673 = vpop.f32.mrb[0].mxu0
  %v674 = vadd.f32 0.0, %v673
  %v675 = vpop.f32.mrb[0].mxu0
  %v676 = vadd.f32 0.0, %v675
  %v677 = vpop.f32.mrb[0].mxu0
  %v678 = vadd.f32 0.0, %v677
  %679 = vdwg.mxu0
  %680 = vmatprep.subr.bf16.mxu0 %v214
  %681 = vmatpush1.bf16.msra.mxu0 %v213
  %682 = vmatprep.subr.bf16.mxu0 %v223
  %683 = vmatpush1.bf16.msra.mxu0 %v222
  %684 = vmatprep.subr.bf16.mxu0 0
  %685 = vmatpush1.bf16.msra.mxu0 0
  %686 = vmatprep.subr.bf16.mxu0 0
  %687 = vmatpush1.bf16.msra.mxu0 0
  %688 = vmatprep.subr.bf16.mxu0 0
  %689 = vmatpush1.bf16.msra.mxu0 0
  %690 = vmatprep.subr.bf16.mxu0 0
  %691 = vmatpush1.bf16.msra.mxu0 0
  %692 = vmatprep.subr.bf16.mxu0 0
  %693 = vmatpush1.bf16.msra.mxu0 0
  %694 = vmatprep.subr.bf16.mxu0 0
  %695 = vmatpush1.bf16.msra.mxu0 0
  %696 = vmatprep.subr.bf16.mxu0 0
  %697 = vmatpush1.bf16.msra.mxu0 0
  %698 = vmatprep.subr.bf16.mxu0 0
  %699 = vmatpush1.bf16.msra.mxu0 0
  %700 = vmatprep.subr.bf16.mxu0 0
  %701 = vmatpush1.bf16.msra.mxu0 0
  %702 = vmatprep.subr.bf16.mxu0 0
  %703 = vmatpush1.bf16.msra.mxu0 0
  %704 = vmatprep.subr.bf16.mxu0 0
  %705 = vmatpush1.bf16.msra.mxu0 0
  %706 = vmatprep.subr.bf16.mxu0 0
  %707 = vmatpush1.bf16.msra.mxu0 0
  %708 = vmatprep.subr.bf16.mxu0 0
  %709 = vmatpush1.bf16.msra.mxu0 0
  %710 = vmatprep.subr.bf16.mxu0 0
  %711 = vmatpush1.bf16.msra.mxu0 0
  %712 = vmatprep.mubr.bf16.mxu0 0
  %713 = vmatmul.mubr.bf16.gmra.mrb[0].mxu0 %v247
  %v714 = vpop.f32.mrb[0].mxu0
  %v715 = vadd.f32 0.0, %v714
  %v716 = vpop.f32.mrb[0].mxu0
  %v717 = vadd.f32 0.0, %v716
  %v718 = vpop.f32.mrb[0].mxu0
  %v719 = vadd.f32 0.0, %v718
  %v720 = vpop.f32.mrb[0].mxu0
  %v721 = vadd.f32 0.0, %v720
  %722 = vmatprep.mubr.bf16.mxu0 0
  %723 = vmatmul.mubr.bf16.gmra.mrb[0].mxu0 %v250
  %v724 = vpop.f32.mrb[0].mxu0
  %v725 = vadd.f32 0.0, %v724
  %v726 = vpop.f32.mrb[0].mxu0
  %v727 = vadd.f32 0.0, %v726
  %v728 = vpop.f32.mrb[0].mxu0
  %v729 = vadd.f32 0.0, %v728
  %v730 = vpop.f32.mrb[0].mxu0
  %v731 = vadd.f32 0.0, %v730
  %732 = vmatprep.mubr.bf16.mxu0 0
  %733 = vmatmul.mubr.bf16.gmra.mrb[0].mxu0 %v253
  %v734 = vpop.f32.mrb[0].mxu0
  %v735 = vadd.f32 0.0, %v734
  %v736 = vpop.f32.mrb[0].mxu0
  %v737 = vadd.f32 0.0, %v736
  %v738 = vpop.f32.mrb[0].mxu0
  %v739 = vadd.f32 0.0, %v738
  %v740 = vpop.f32.mrb[0].mxu0
  %v741 = vadd.f32 0.0, %v740
  %742 = vmatprep.mubr.bf16.mxu0 0
  %743 = vmatmul.mubr.bf16.gmra.mrb[0].mxu0 %v256
  %v744 = vpop.f32.mrb[0].mxu0
  %v745 = vadd.f32 0.0, %v744
  %v746 = vpop.f32.mrb[0].mxu0
  %v747 = vadd.f32 0.0, %v746
  %v748 = vpop.f32.mrb[0].mxu0
  %v749 = vadd.f32 0.0, %v748
  %v750 = vpop.f32.mrb[0].mxu0
  %v751 = vadd.f32 0.0, %v750
  %752 = vmatprep.mubr.bf16.mxu0 0
  %753 = vmatmul.mubr.bf16.gmra.mrb[0].mxu0 %v259
  %v754 = vpop.f32.mrb[0].mxu0
  %v755 = vadd.f32 0.0, %v754
  %v756 = vpop.f32.mrb[0].mxu0
  %v757 = vadd.f32 0.0, %v756
  %v758 = vpop.f32.mrb[0].mxu0
  %v759 = vadd.f32 0.0, %v758
  %v760 = vpop.f32.mrb[0].mxu0
  %v761 = vadd.f32 0.0, %v760
  %762 = vmatprep.mubr.bf16.mxu0 0
  %763 = vmatmul.mubr.bf16.gmra.mrb[0].mxu0 %v262
  %v764 = vpop.f32.mrb[0].mxu0
  %v765 = vadd.f32 0.0, %v764
  %v766 = vpop.f32.mrb[0].mxu0
  %v767 = vadd.f32 0.0, %v766
  %v768 = vpop.f32.mrb[0].mxu0
  %v769 = vadd.f32 0.0, %v768
  %v770 = vpop.f32.mrb[0].mxu0
  %v771 = vadd.f32 0.0, %v770
  %772 = vmatprep.mubr.bf16.mxu0 0
  %773 = vmatmul.mubr.bf16.gmra.mrb[0].mxu0 %v265
  %v774 = vpop.f32.mrb[0].mxu0
  %v775 = vadd.f32 0.0, %v774
  %v776 = vpop.f32.mrb[0].mxu0
  %v777 = vadd.f32 0.0, %v776
  %v778 = vpop.f32.mrb[0].mxu0
  %v779 = vadd.f32 0.0, %v778
  %v780 = vpop.f32.mrb[0].mxu0
  %v781 = vadd.f32 0.0, %v780
  %782 = vmatprep.mubr.bf16.mxu0 0
  %783 = vmatmul.mubr.bf16.gmra.mrb[0].mxu0 %v268
  %v784 = vpop.f32.mrb[0].mxu0
  %v785 = vadd.f32 0.0, %v784
  %v786 = vpop.f32.mrb[0].mxu0
  %v787 = vadd.f32 0.0, %v786
  %v788 = vpop.f32.mrb[0].mxu0
  %v789 = vadd.f32 0.0, %v788
  %v790 = vpop.f32.mrb[0].mxu0
  %v791 = vadd.f32 0.0, %v790
  %792 = vmatprep.mubr.bf16.mxu0 0
  %793 = vmatmul.mubr.bf16.gmra.mrb[0].mxu0 %v271
  %v794 = vpop.f32.mrb[0].mxu0
  %v795 = vadd.f32 0.0, %v794
  %v796 = vpop.f32.mrb[0].mxu0
  %v797 = vadd.f32 0.0, %v796
  %v798 = vpop.f32.mrb[0].mxu0
  %v799 = vadd.f32 0.0, %v798
  %v800 = vpop.f32.mrb[0].mxu0
  %v801 = vadd.f32 0.0, %v800
  %802 = vmatprep.mubr.bf16.mxu0 0
  %803 = vmatmul.mubr.bf16.gmra.mrb[0].mxu0 %v274
  %v804 = vpop.f32.mrb[0].mxu0
  %v805 = vadd.f32 0.0, %v804
  %v806 = vpop.f32.mrb[0].mxu0
  %v807 = vadd.f32 0.0, %v806
  %v808 = vpop.f32.mrb[0].mxu0
  %v809 = vadd.f32 0.0, %v808
  %v810 = vpop.f32.mrb[0].mxu0
  %v811 = vadd.f32 0.0, %v810
  %812 = vmatprep.mubr.bf16.mxu0 0
  %813 = vmatmul.mubr.bf16.gmra.mrb[0].mxu0 %v277
  %v814 = vpop.f32.mrb[0].mxu0
  %v815 = vadd.f32 0.0, %v814
  %v816 = vpop.f32.mrb[0].mxu0
  %v817 = vadd.f32 0.0, %v816
  %v818 = vpop.f32.mrb[0].mxu0
  %v819 = vadd.f32 0.0, %v818
  %v820 = vpop.f32.mrb[0].mxu0
  %v821 = vadd.f32 0.0, %v820
  %822 = vmatprep.mubr.bf16.mxu0 0
  %823 = vmatmul.mubr.bf16.gmra.mrb[0].mxu0 %v280
  %v824 = vpop.f32.mrb[0].mxu0
  %v825 = vadd.f32 0.0, %v824
  %v826 = vpop.f32.mrb[0].mxu0
  %v827 = vadd.f32 0.0, %v826
  %v828 = vpop.f32.mrb[0].mxu0
  %v829 = vadd.f32 0.0, %v828
  %v830 = vpop.f32.mrb[0].mxu0
  %v831 = vadd.f32 0.0, %v830
  %832 = vmatprep.mubr.bf16.mxu0 0
  %833 = vmatmul.mubr.bf16.gmra.mrb[0].mxu0 %v283
  %v834 = vpop.f32.mrb[0].mxu0
  %v835 = vadd.f32 0.0, %v834
  %v836 = vpop.f32.mrb[0].mxu0
  %v837 = vadd.f32 0.0, %v836
  %v838 = vpop.f32.mrb[0].mxu0
  %v839 = vadd.f32 0.0, %v838
  %v840 = vpop.f32.mrb[0].mxu0
  %v841 = vadd.f32 0.0, %v840
  %842 = vmatprep.mubr.bf16.mxu0 0
  %843 = vmatmul.mubr.bf16.gmra.mrb[0].mxu0 %v286
  %v844 = vpop.f32.mrb[0].mxu0
  %v845 = vadd.f32 0.0, %v844
  %v846 = vpop.f32.mrb[0].mxu0
  %v847 = vadd.f32 0.0, %v846
  %v848 = vpop.f32.mrb[0].mxu0
  %v849 = vadd.f32 0.0, %v848
  %v850 = vpop.f32.mrb[0].mxu0
  %v851 = vadd.f32 0.0, %v850
  %852 = vmatprep.mubr.bf16.mxu0 0
  %853 = vmatmul.mubr.bf16.gmra.mrb[0].mxu0 %v289
  %v854 = vpop.f32.mrb[0].mxu0
  %v855 = vadd.f32 0.0, %v854
  %v856 = vpop.f32.mrb[0].mxu0
  %v857 = vadd.f32 0.0, %v856
  %v858 = vpop.f32.mrb[0].mxu0
  %v859 = vadd.f32 0.0, %v858
  %v860 = vpop.f32.mrb[0].mxu0
  %v861 = vadd.f32 0.0, %v860
  %862 = vmatprep.mubr.bf16.mxu0 0
  %863 = vmatmul.mubr.bf16.gmra.mrb[0].mxu0 %v292
  %v864 = vpop.f32.mrb[0].mxu0
  %v865 = vadd.f32 0.0, %v864
  %v866 = vpop.f32.mrb[0].mxu0
  %v867 = vadd.f32 0.0, %v866
  %v868 = vpop.f32.mrb[0].mxu0
  %v869 = vadd.f32 0.0, %v868
  %v870 = vpop.f32.mrb[0].mxu0
  %v871 = vadd.f32 0.0, %v870
  %872 = vdwg.mxu0
  %873 = vmatprep.subr.bf16.mxu0 %v216
  %874 = vmatpush1.bf16.msra.mxu0 %v215
  %875 = vmatprep.subr.bf16.mxu0 %v225
  %876 = vmatpush1.bf16.msra.mxu0 %v224
  %877 = vmatprep.subr.bf16.mxu0 0
  %878 = vmatpush1.bf16.msra.mxu0 0
  %879 = vmatprep.subr.bf16.mxu0 0
  %880 = vmatpush1.bf16.msra.mxu0 0
  %881 = vmatprep.subr.bf16.mxu0 0
  %882 = vmatpush1.bf16.msra.mxu0 0
  %883 = vmatprep.subr.bf16.mxu0 0
  %884 = vmatpush1.bf16.msra.mxu0 0
  %885 = vmatprep.subr.bf16.mxu0 0
  %886 = vmatpush1.bf16.msra.mxu0 0
  %887 = vmatprep.subr.bf16.mxu0 0
  %888 = vmatpush1.bf16.msra.mxu0 0
  %889 = vmatprep.subr.bf16.mxu0 0
  %890 = vmatpush1.bf16.msra.mxu0 0
  %891 = vmatprep.subr.bf16.mxu0 0
  %892 = vmatpush1.bf16.msra.mxu0 0
  %893 = vmatprep.subr.bf16.mxu0 0
  %894 = vmatpush1.bf16.msra.mxu0 0
  %895 = vmatprep.subr.bf16.mxu0 0
  %896 = vmatpush1.bf16.msra.mxu0 0
  %897 = vmatprep.subr.bf16.mxu0 0
  %898 = vmatpush1.bf16.msra.mxu0 0
  %899 = vmatprep.subr.bf16.mxu0 0
  %900 = vmatpush1.bf16.msra.mxu0 0
  %901 = vmatprep.subr.bf16.mxu0 0
  %902 = vmatpush1.bf16.msra.mxu0 0
  %903 = vmatprep.subr.bf16.mxu0 0
  %904 = vmatpush1.bf16.msra.mxu0 0
  %905 = vmatprep.mubr.bf16.mxu0 0
  %906 = vmatmul.mubr.bf16.gmra.mrb[0].mxu0 %v247
  %v907 = vpop.f32.mrb[0].mxu0
  %v908 = vadd.f32 0.0, %v907
  %v909 = vpop.f32.mrb[0].mxu0
  %v910 = vadd.f32 0.0, %v909
  %v911 = vpop.f32.mrb[0].mxu0
  %v912 = vadd.f32 0.0, %v911
  %v913 = vpop.f32.mrb[0].mxu0
  %v914 = vadd.f32 0.0, %v913
  %915 = vmatprep.mubr.bf16.mxu0 0
  %916 = vmatmul.mubr.bf16.gmra.mrb[0].mxu0 %v250
  %v917 = vpop.f32.mrb[0].mxu0
  %v918 = vadd.f32 0.0, %v917
  %v919 = vpop.f32.mrb[0].mxu0
  %v920 = vadd.f32 0.0, %v919
  %v921 = vpop.f32.mrb[0].mxu0
  %v922 = vadd.f32 0.0, %v921
  %v923 = vpop.f32.mrb[0].mxu0
  %v924 = vadd.f32 0.0, %v923
  %925 = vmatprep.mubr.bf16.mxu0 0
  %926 = vmatmul.mubr.bf16.gmra.mrb[0].mxu0 %v253
  %v927 = vpop.f32.mrb[0].mxu0
  %v928 = vadd.f32 0.0, %v927
  %v929 = vpop.f32.mrb[0].mxu0
  %v930 = vadd.f32 0.0, %v929
  %v931 = vpop.f32.mrb[0].mxu0
  %v932 = vadd.f32 0.0, %v931
  %v933 = vpop.f32.mrb[0].mxu0
  %v934 = vadd.f32 0.0, %v933
  %935 = vmatprep.mubr.bf16.mxu0 0
  %936 = vmatmul.mubr.bf16.gmra.mrb[0].mxu0 %v256
  %v937 = vpop.f32.mrb[0].mxu0
  %v938 = vadd.f32 0.0, %v937
  %v939 = vpop.f32.mrb[0].mxu0
  %v940 = vadd.f32 0.0, %v939
  %v941 = vpop.f32.mrb[0].mxu0
  %v942 = vadd.f32 0.0, %v941
  %v943 = vpop.f32.mrb[0].mxu0
  %v944 = vadd.f32 0.0, %v943
  %945 = vmatprep.mubr.bf16.mxu0 0
  %946 = vmatmul.mubr.bf16.gmra.mrb[0].mxu0 %v259
  %v947 = vpop.f32.mrb[0].mxu0
  %v948 = vadd.f32 0.0, %v947
  %v949 = vpop.f32.mrb[0].mxu0
  %v950 = vadd.f32 0.0, %v949
  %v951 = vpop.f32.mrb[0].mxu0
  %v952 = vadd.f32 0.0, %v951
  %v953 = vpop.f32.mrb[0].mxu0
  %v954 = vadd.f32 0.0, %v953
  %955 = vmatprep.mubr.bf16.mxu0 0
  %956 = vmatmul.mubr.bf16.gmra.mrb[0].mxu0 %v262
  %v957 = vpop.f32.mrb[0].mxu0
  %v958 = vadd.f32 0.0, %v957
  %v959 = vpop.f32.mrb[0].mxu0
  %v960 = vadd.f32 0.0, %v959
  %v961 = vpop.f32.mrb[0].mxu0
  %v962 = vadd.f32 0.0, %v961
  %v963 = vpop.f32.mrb[0].mxu0
  %v964 = vadd.f32 0.0, %v963
  %965 = vmatprep.mubr.bf16.mxu0 0
  %966 = vmatmul.mubr.bf16.gmra.mrb[0].mxu0 %v265
  %v967 = vpop.f32.mrb[0].mxu0
  %v968 = vadd.f32 0.0, %v967
  %v969 = vpop.f32.mrb[0].mxu0
  %v970 = vadd.f32 0.0, %v969
  %v971 = vpop.f32.mrb[0].mxu0
  %v972 = vadd.f32 0.0, %v971
  %v973 = vpop.f32.mrb[0].mxu0
  %v974 = vadd.f32 0.0, %v973
  %975 = vmatprep.mubr.bf16.mxu0 0
  %976 = vmatmul.mubr.bf16.gmra.mrb[0].mxu0 %v268
  %v977 = vpop.f32.mrb[0].mxu0
  %v978 = vadd.f32 0.0, %v977
  %v979 = vpop.f32.mrb[0].mxu0
  %v980 = vadd.f32 0.0, %v979
  %v981 = vpop.f32.mrb[0].mxu0
  %v982 = vadd.f32 0.0, %v981
  %v983 = vpop.f32.mrb[0].mxu0
  %v984 = vadd.f32 0.0, %v983
  %985 = vmatprep.mubr.bf16.mxu0 0
  %986 = vmatmul.mubr.bf16.gmra.mrb[0].mxu0 %v271
  %v987 = vpop.f32.mrb[0].mxu0
  %v988 = vadd.f32 0.0, %v987
  %v989 = vpop.f32.mrb[0].mxu0
  %v990 = vadd.f32 0.0, %v989
  %v991 = vpop.f32.mrb[0].mxu0
  %v992 = vadd.f32 0.0, %v991
  %v993 = vpop.f32.mrb[0].mxu0
  %v994 = vadd.f32 0.0, %v993
  %995 = vmatprep.mubr.bf16.mxu0 0
  %996 = vmatmul.mubr.bf16.gmra.mrb[0].mxu0 %v274
  %v997 = vpop.f32.mrb[0].mxu0
  %v998 = vadd.f32 0.0, %v997
  %v999 = vpop.f32.mrb[0].mxu0
  %v1000 = vadd.f32 0.0, %v999
  %v1001 = vpop.f32.mrb[0].mxu0
  %v1002 = vadd.f32 0.0, %v1001
  %v1003 = vpop.f32.mrb[0].mxu0
  %v1004 = vadd.f32 0.0, %v1003
  %1005 = vmatprep.mubr.bf16.mxu0 0
  %1006 = vmatmul.mubr.bf16.gmra.mrb[0].mxu0 %v277
  %v1007 = vpop.f32.mrb[0].mxu0
  %v1008 = vadd.f32 0.0, %v1007
  %v1009 = vpop.f32.mrb[0].mxu0
  %v1010 = vadd.f32 0.0, %v1009
  %v1011 = vpop.f32.mrb[0].mxu0
  %v1012 = vadd.f32 0.0, %v1011
  %v1013 = vpop.f32.mrb[0].mxu0
  %v1014 = vadd.f32 0.0, %v1013
  %1015 = vmatprep.mubr.bf16.mxu0 0
  %1016 = vmatmul.mubr.bf16.gmra.mrb[0].mxu0 %v280
  %v1017 = vpop.f32.mrb[0].mxu0
  %v1018 = vadd.f32 0.0, %v1017
  %v1019 = vpop.f32.mrb[0].mxu0
  %v1020 = vadd.f32 0.0, %v1019
  %v1021 = vpop.f32.mrb[0].mxu0
  %v1022 = vadd.f32 0.0, %v1021
  %v1023 = vpop.f32.mrb[0].mxu0
  %v1024 = vadd.f32 0.0, %v1023
  %1025 = vmatprep.mubr.bf16.mxu0 0
  %1026 = vmatmul.mubr.bf16.gmra.mrb[0].mxu0 %v283
  %v1027 = vpop.f32.mrb[0].mxu0
  %v1028 = vadd.f32 0.0, %v1027
  %v1029 = vpop.f32.mrb[0].mxu0
  %v1030 = vadd.f32 0.0, %v1029
  %v1031 = vpop.f32.mrb[0].mxu0
  %v1032 = vadd.f32 0.0, %v1031
  %v1033 = vpop.f32.mrb[0].mxu0
  %v1034 = vadd.f32 0.0, %v1033
  %1035 = vmatprep.mubr.bf16.mxu0 0
  %1036 = vmatmul.mubr.bf16.gmra.mrb[0].mxu0 %v286
  %v1037 = vpop.f32.mrb[0].mxu0
  %v1038 = vadd.f32 0.0, %v1037
  %v1039 = vpop.f32.mrb[0].mxu0
  %v1040 = vadd.f32 0.0, %v1039
  %v1041 = vpop.f32.mrb[0].mxu0
  %v1042 = vadd.f32 0.0, %v1041
  %v1043 = vpop.f32.mrb[0].mxu0
  %v1044 = vadd.f32 0.0, %v1043
  %1045 = vmatprep.mubr.bf16.mxu0 0
  %1046 = vmatmul.mubr.bf16.gmra.mrb[0].mxu0 %v289
  %v1047 = vpop.f32.mrb[0].mxu0
  %v1048 = vadd.f32 0.0, %v1047
  %v1049 = vpop.f32.mrb[0].mxu0
  %v1050 = vadd.f32 0.0, %v1049
  %v1051 = vpop.f32.mrb[0].mxu0
  %v1052 = vadd.f32 0.0, %v1051
  %v1053 = vpop.f32.mrb[0].mxu0
  %v1054 = vadd.f32 0.0, %v1053
  %1055 = vmatprep.mubr.bf16.mxu0 0
  %1056 = vmatmul.mubr.bf16.gmra.mrb[0].mxu0 %v292
  %v1057 = vpop.f32.mrb[0].mxu0
  %v1058 = vadd.f32 0.0, %v1057
  %v1059 = vpop.f32.mrb[0].mxu0
  %v1060 = vadd.f32 0.0, %v1059
  %v1061 = vpop.f32.mrb[0].mxu0
  %v1062 = vadd.f32 0.0, %v1061
  %v1063 = vpop.f32.mrb[0].mxu0
  %v1064 = vadd.f32 0.0, %v1063
  %1065 = vdwg.mxu0
  %1066 = vmatprep.subr.bf16.mxu0 0
  %1067 = vmatpush1.bf16.msra.mxu0 %v217
  %1068 = vmatprep.subr.bf16.mxu0 0
  %1069 = vmatpush1.bf16.msra.mxu0 %v226
  %1070 = vmatprep.subr.bf16.mxu0 0
  %1071 = vmatpush1.bf16.msra.mxu0 0
  %1072 = vmatprep.subr.bf16.mxu0 0
  %1073 = vmatpush1.bf16.msra.mxu0 0
  %1074 = vmatprep.subr.bf16.mxu0 0
  %1075 = vmatpush1.bf16.msra.mxu0 0
  %1076 = vmatprep.subr.bf16.mxu0 0
  %1077 = vmatpush1.bf16.msra.mxu0 0
  %1078 = vmatprep.subr.bf16.mxu0 0
  %1079 = vmatpush1.bf16.msra.mxu0 0
  %1080 = vmatprep.subr.bf16.mxu0 0
  %1081 = vmatpush1.bf16.msra.mxu0 0
  %1082 = vmatprep.subr.bf16.mxu0 0
  %1083 = vmatpush1.bf16.msra.mxu0 0
  %1084 = vmatprep.subr.bf16.mxu0 0
  %1085 = vmatpush1.bf16.msra.mxu0 0
  %1086 = vmatprep.subr.bf16.mxu0 0
  %1087 = vmatpush1.bf16.msra.mxu0 0
  %1088 = vmatprep.subr.bf16.mxu0 0
  %1089 = vmatpush1.bf16.msra.mxu0 0
  %1090 = vmatprep.subr.bf16.mxu0 0
  %1091 = vmatpush1.bf16.msra.mxu0 0
  %1092 = vmatprep.subr.bf16.mxu0 0
  %1093 = vmatpush1.bf16.msra.mxu0 0
  %1094 = vmatprep.subr.bf16.mxu0 0
  %1095 = vmatpush1.bf16.msra.mxu0 0
  %1096 = vmatprep.subr.bf16.mxu0 0
  %1097 = vmatpush1.bf16.msra.mxu0 0
  %1098 = vmatprep.mubr.bf16.mxu0 0
  %1099 = vmatmul.mubr.bf16.gmra.mrb[0].mxu0 %v247
  %v1100 = vpop.f32.mrb[0].mxu0
  %v1101 = vadd.f32 0.0, %v1100
  %v1102 = vpop.f32.mrb[0].mxu0
  %v1103 = vpop.f32.mrb[0].mxu0
  %v1104 = vadd.f32 0.0, %v1103
  %v1105 = vpop.f32.mrb[0].mxu0
  %1106 = vmatprep.mubr.bf16.mxu0 0
  %1107 = vmatmul.mubr.bf16.gmra.mrb[0].mxu0 %v250
  %v1108 = vpop.f32.mrb[0].mxu0
  %v1109 = vadd.f32 0.0, %v1108
  %v1110 = vpop.f32.mrb[0].mxu0
  %v1111 = vpop.f32.mrb[0].mxu0
  %v1112 = vadd.f32 0.0, %v1111
  %v1113 = vpop.f32.mrb[0].mxu0
  %1114 = vmatprep.mubr.bf16.mxu0 0
  %1115 = vmatmul.mubr.bf16.gmra.mrb[0].mxu0 %v253
  %v1116 = vpop.f32.mrb[0].mxu0
  %v1117 = vadd.f32 0.0, %v1116
  %v1118 = vpop.f32.mrb[0].mxu0
  %v1119 = vpop.f32.mrb[0].mxu0
  %v1120 = vadd.f32 0.0, %v1119
  %v1121 = vpop.f32.mrb[0].mxu0
  %1122 = vmatprep.mubr.bf16.mxu0 0
  %1123 = vmatmul.mubr.bf16.gmra.mrb[0].mxu0 %v256
  %v1124 = vpop.f32.mrb[0].mxu0
  %v1125 = vadd.f32 0.0, %v1124
  %v1126 = vpop.f32.mrb[0].mxu0
  %v1127 = vpop.f32.mrb[0].mxu0
  %v1128 = vadd.f32 0.0, %v1127
  %v1129 = vpop.f32.mrb[0].mxu0
  %1130 = vmatprep.mubr.bf16.mxu0 0
  %1131 = vmatmul.mubr.bf16.gmra.mrb[0].mxu0 %v259
  %v1132 = vpop.f32.mrb[0].mxu0
  %v1133 = vadd.f32 0.0, %v1132
  %v1134 = vpop.f32.mrb[0].mxu0
  %v1135 = vpop.f32.mrb[0].mxu0
  %v1136 = vadd.f32 0.0, %v1135
  %v1137 = vpop.f32.mrb[0].mxu0
  %1138 = vmatprep.mubr.bf16.mxu0 0
  %1139 = vmatmul.mubr.bf16.gmra.mrb[0].mxu0 %v262
  %v1140 = vpop.f32.mrb[0].mxu0
  %v1141 = vadd.f32 0.0, %v1140
  %v1142 = vpop.f32.mrb[0].mxu0
  %v1143 = vpop.f32.mrb[0].mxu0
  %v1144 = vadd.f32 0.0, %v1143
  %v1145 = vpop.f32.mrb[0].mxu0
  %1146 = vmatprep.mubr.bf16.mxu0 0
  %1147 = vmatmul.mubr.bf16.gmra.mrb[0].mxu0 %v265
  %v1148 = vpop.f32.mrb[0].mxu0
  %v1149 = vadd.f32 0.0, %v1148
  %v1150 = vpop.f32.mrb[0].mxu0
  %v1151 = vpop.f32.mrb[0].mxu0
  %v1152 = vadd.f32 0.0, %v1151
  %v1153 = vpop.f32.mrb[0].mxu0
  %1154 = vmatprep.mubr.bf16.mxu0 0
  %1155 = vmatmul.mubr.bf16.gmra.mrb[0].mxu0 %v268
  %v1156 = vpop.f32.mrb[0].mxu0
  %v1157 = vadd.f32 0.0, %v1156
  %v1158 = vpop.f32.mrb[0].mxu0
  %v1159 = vpop.f32.mrb[0].mxu0
  %v1160 = vadd.f32 0.0, %v1159
  %v1161 = vpop.f32.mrb[0].mxu0
  %1162 = vmatprep.mubr.bf16.mxu0 0
  %1163 = vmatmul.mubr.bf16.gmra.mrb[0].mxu0 %v271
  %v1164 = vpop.f32.mrb[0].mxu0
  %v1165 = vadd.f32 0.0, %v1164
  %v1166 = vpop.f32.mrb[0].mxu0
  %v1167 = vpop.f32.mrb[0].mxu0
  %v1168 = vadd.f32 0.0, %v1167
  %v1169 = vpop.f32.mrb[0].mxu0
  %1170 = vmatprep.mubr.bf16.mxu0 0
  %1171 = vmatmul.mubr.bf16.gmra.mrb[0].mxu0 %v274
  %v1172 = vpop.f32.mrb[0].mxu0
  %v1173 = vadd.f32 0.0, %v1172
  %v1174 = vpop.f32.mrb[0].mxu0
  %v1175 = vpop.f32.mrb[0].mxu0
  %v1176 = vadd.f32 0.0, %v1175
  %v1177 = vpop.f32.mrb[0].mxu0
  %1178 = vmatprep.mubr.bf16.mxu0 0
  %1179 = vmatmul.mubr.bf16.gmra.mrb[0].mxu0 %v277
  %v1180 = vpop.f32.mrb[0].mxu0
  %v1181 = vadd.f32 0.0, %v1180
  %v1182 = vpop.f32.mrb[0].mxu0
  %v1183 = vpop.f32.mrb[0].mxu0
  %v1184 = vadd.f32 0.0, %v1183
  %v1185 = vpop.f32.mrb[0].mxu0
  %1186 = vmatprep.mubr.bf16.mxu0 0
  %1187 = vmatmul.mubr.bf16.gmra.mrb[0].mxu0 %v280
  %v1188 = vpop.f32.mrb[0].mxu0
  %v1189 = vadd.f32 0.0, %v1188
  %v1190 = vpop.f32.mrb[0].mxu0
  %v1191 = vpop.f32.mrb[0].mxu0
  %v1192 = vadd.f32 0.0, %v1191
  %v1193 = vpop.f32.mrb[0].mxu0
  %1194 = vmatprep.mubr.bf16.mxu0 0
  %1195 = vmatmul.mubr.bf16.gmra.mrb[0].mxu0 %v283
  %v1196 = vpop.f32.mrb[0].mxu0
  %v1197 = vadd.f32 0.0, %v1196
  %v1198 = vpop.f32.mrb[0].mxu0
  %v1199 = vpop.f32.mrb[0].mxu0
  %v1200 = vadd.f32 0.0, %v1199
  %v1201 = vpop.f32.mrb[0].mxu0
  %1202 = vmatprep.mubr.bf16.mxu0 0
  %1203 = vmatmul.mubr.bf16.gmra.mrb[0].mxu0 %v286
  %v1204 = vpop.f32.mrb[0].mxu0
  %v1205 = vadd.f32 0.0, %v1204
  %v1206 = vpop.f32.mrb[0].mxu0
  %v1207 = vpop.f32.mrb[0].mxu0
  %v1208 = vadd.f32 0.0, %v1207
  %v1209 = vpop.f32.mrb[0].mxu0
  %1210 = vmatprep.mubr.bf16.mxu0 0
  %1211 = vmatmul.mubr.bf16.gmra.mrb[0].mxu0 %v289
  %v1212 = vpop.f32.mrb[0].mxu0
  %v1213 = vadd.f32 0.0, %v1212
  %v1214 = vpop.f32.mrb[0].mxu0
  %v1215 = vpop.f32.mrb[0].mxu0
  %v1216 = vadd.f32 0.0, %v1215
  %v1217 = vpop.f32.mrb[0].mxu0
  %1218 = vmatprep.mubr.bf16.mxu0 0
  %1219 = vmatmul.mubr.bf16.gmra.mrb[0].mxu0 %v292
  %v1220 = vpop.f32.mrb[0].mxu0
  %v1221 = vadd.f32 0.0, %v1220
  %v1222 = vpop.f32.mrb[0].mxu0
  %v1223 = vpop.f32.mrb[0].mxu0
  %v1224 = vadd.f32 0.0, %v1223
  %v1225 = vpop.f32.mrb[0].mxu0
  %1226 = vdwg.mxu0
  %vm1259 = vcmask 1046528
  %v1260 = vrot.slane %v331, 1
  %v1261 = vrot.slane %v335, 1
  %v1262 = vsel %vm1259, %v1260, %v1261
  %v1263 = vrot.slane %v341, 1
  %v1264 = vrot.slane %v345, 1
  %v1265 = vsel %vm1259, %v1263, %v1264
  %v1266 = vrot.slane %v351, 1
  %v1267 = vrot.slane %v355, 1
  %v1268 = vsel %vm1259, %v1266, %v1267
  %v1269 = vrot.slane %v361, 1
  %v1270 = vrot.slane %v365, 1
  %v1271 = vsel %vm1259, %v1269, %v1270
  %v1272 = vrot.slane %v371, 1
  %v1273 = vrot.slane %v375, 1
  %v1274 = vsel %vm1259, %v1272, %v1273
  %v1275 = vrot.slane %v381, 1
  %v1276 = vrot.slane %v385, 1
  %v1277 = vsel %vm1259, %v1275, %v1276
  %v1278 = vrot.slane %v391, 1
  %v1279 = vrot.slane %v395, 1
  %v1280 = vsel %vm1259, %v1278, %v1279
  %v1281 = vrot.slane %v401, 1
  %v1282 = vrot.slane %v405, 1
  %v1283 = vsel %vm1259, %v1281, %v1282
  %v1284 = vrot.slane %v411, 1
  %v1285 = vrot.slane %v415, 1
  %v1286 = vsel %vm1259, %v1284, %v1285
  %v1287 = vrot.slane %v421, 1
  %v1288 = vrot.slane %v425, 1
  %v1289 = vsel %vm1259, %v1287, %v1288
  %v1290 = vrot.slane %v431, 1
  %v1291 = vrot.slane %v435, 1
  %v1292 = vsel %vm1259, %v1290, %v1291
  %v1293 = vrot.slane %v441, 1
  %v1294 = vrot.slane %v445, 1
  %v1295 = vsel %vm1259, %v1293, %v1294
  %v1296 = vrot.slane %v451, 1
  %v1297 = vrot.slane %v455, 1
  %v1298 = vsel %vm1259, %v1296, %v1297
  %v1299 = vrot.slane %v461, 1
  %v1300 = vrot.slane %v465, 1
  %v1301 = vsel %vm1259, %v1299, %v1300
  %v1302 = vrot.slane %v471, 1
  %v1303 = vrot.slane %v475, 1
  %v1304 = vsel %vm1259, %v1302, %v1303
  %v1305 = vrot.slane %v481, 1
  %v1306 = vrot.slane %v485, 1
  %v1307 = vsel %vm1259, %v1305, %v1306
  %v1340 = vadd.f32 %v329, %v1262
  %v1341 = vadd.f32 %v333, %v1261
  %v1342 = vadd.f32 %v339, %v1265
  %v1343 = vadd.f32 %v343, %v1264
  %v1344 = vadd.f32 %v349, %v1268
  %v1345 = vadd.f32 %v353, %v1267
  %v1346 = vadd.f32 %v359, %v1271
  %v1347 = vadd.f32 %v363, %v1270
  %v1348 = vadd.f32 %v369, %v1274
  %v1349 = vadd.f32 %v373, %v1273
  %v1350 = vadd.f32 %v379, %v1277
  %v1351 = vadd.f32 %v383, %v1276
  %v1352 = vadd.f32 %v389, %v1280
  %v1353 = vadd.f32 %v393, %v1279
  %v1354 = vadd.f32 %v399, %v1283
  %v1355 = vadd.f32 %v403, %v1282
  %v1356 = vadd.f32 %v409, %v1286
  %v1357 = vadd.f32 %v413, %v1285
  %v1358 = vadd.f32 %v419, %v1289
  %v1359 = vadd.f32 %v423, %v1288
  %v1360 = vadd.f32 %v429, %v1292
  %v1361 = vadd.f32 %v433, %v1291
  %v1362 = vadd.f32 %v439, %v1295
  %v1363 = vadd.f32 %v443, %v1294
  %v1364 = vadd.f32 %v449, %v1298
  %v1365 = vadd.f32 %v453, %v1297
  %v1366 = vadd.f32 %v459, %v1301
  %v1367 = vadd.f32 %v463, %v1300
  %v1368 = vadd.f32 %v469, %v1304
  %v1369 = vadd.f32 %v473, %v1303
  %v1370 = vadd.f32 %v479, %v1307
  %v1371 = vadd.f32 %v483, %v1306
  %v1372 = vsel %vm1259, %v1341, -inf
  %v1373 = vmax.f32 %v1340, %v1372
  %v1374 = vrot.slane %v1373, 4
  %v1375 = vmax.f32 %v1373, %v1374
  %v1376 = vrot.slane %v1375, 2
  %v1377 = vmax.f32 %v1375, %v1376
  %v1378 = vrot.slane %v1377, 1
  %v1379 = vmax.f32 %v1377, %v1378
  %v1380 = vsel %vm1259, %v1343, -inf
  %v1381 = vmax.f32 %v1342, %v1380
  %v1382 = vrot.slane %v1381, 4
  %v1383 = vmax.f32 %v1381, %v1382
  %v1384 = vrot.slane %v1383, 2
  %v1385 = vmax.f32 %v1383, %v1384
  %v1386 = vrot.slane %v1385, 1
  %v1387 = vmax.f32 %v1385, %v1386
  %v1388 = vsel %vm1259, %v1345, -inf
  %v1389 = vmax.f32 %v1344, %v1388
  %v1390 = vrot.slane %v1389, 4
  %v1391 = vmax.f32 %v1389, %v1390
  %v1392 = vrot.slane %v1391, 2
  %v1393 = vmax.f32 %v1391, %v1392
  %v1394 = vrot.slane %v1393, 1
  %v1395 = vmax.f32 %v1393, %v1394
  %v1396 = vsel %vm1259, %v1347, -inf
  %v1397 = vmax.f32 %v1346, %v1396
  %v1398 = vrot.slane %v1397, 4
  %v1399 = vmax.f32 %v1397, %v1398
  %v1400 = vrot.slane %v1399, 2
  %v1401 = vmax.f32 %v1399, %v1400
  %v1402 = vrot.slane %v1401, 1
  %v1403 = vmax.f32 %v1401, %v1402
  %v1404 = vsel %vm1259, %v1349, -inf
  %v1405 = vmax.f32 %v1348, %v1404
  %v1406 = vrot.slane %v1405, 4
  %v1407 = vmax.f32 %v1405, %v1406
  %v1408 = vrot.slane %v1407, 2
  %v1409 = vmax.f32 %v1407, %v1408
  %v1410 = vrot.slane %v1409, 1
  %v1411 = vmax.f32 %v1409, %v1410
  %v1412 = vsel %vm1259, %v1351, -inf
  %v1413 = vmax.f32 %v1350, %v1412
  %v1414 = vrot.slane %v1413, 4
  %v1415 = vmax.f32 %v1413, %v1414
  %v1416 = vrot.slane %v1415, 2
  %v1417 = vmax.f32 %v1415, %v1416
  %v1418 = vrot.slane %v1417, 1
  %v1419 = vmax.f32 %v1417, %v1418
  %v1420 = vsel %vm1259, %v1353, -inf
  %v1421 = vmax.f32 %v1352, %v1420
  %v1422 = vrot.slane %v1421, 4
  %v1423 = vmax.f32 %v1421, %v1422
  %v1424 = vrot.slane %v1423, 2
  %v1425 = vmax.f32 %v1423, %v1424
  %v1426 = vrot.slane %v1425, 1
  %v1427 = vmax.f32 %v1425, %v1426
  %v1428 = vsel %vm1259, %v1355, -inf
  %v1429 = vmax.f32 %v1354, %v1428
  %v1430 = vrot.slane %v1429, 4
  %v1431 = vmax.f32 %v1429, %v1430
  %v1432 = vrot.slane %v1431, 2
  %v1433 = vmax.f32 %v1431, %v1432
  %v1434 = vrot.slane %v1433, 1
  %v1435 = vmax.f32 %v1433, %v1434
  %v1436 = vsel %vm1259, %v1357, -inf
  %v1437 = vmax.f32 %v1356, %v1436
  %v1438 = vrot.slane %v1437, 4
  %v1439 = vmax.f32 %v1437, %v1438
  %v1440 = vrot.slane %v1439, 2
  %v1441 = vmax.f32 %v1439, %v1440
  %v1442 = vrot.slane %v1441, 1
  %v1443 = vmax.f32 %v1441, %v1442
  %v1444 = vsel %vm1259, %v1359, -inf
  %v1445 = vmax.f32 %v1358, %v1444
  %v1446 = vrot.slane %v1445, 4
  %v1447 = vmax.f32 %v1445, %v1446
  %v1448 = vrot.slane %v1447, 2
  %v1449 = vmax.f32 %v1447, %v1448
  %v1450 = vrot.slane %v1449, 1
  %v1451 = vmax.f32 %v1449, %v1450
  %v1452 = vsel %vm1259, %v1361, -inf
  %v1453 = vmax.f32 %v1360, %v1452
  %v1454 = vrot.slane %v1453, 4
  %v1455 = vmax.f32 %v1453, %v1454
  %v1456 = vrot.slane %v1455, 2
  %v1457 = vmax.f32 %v1455, %v1456
  %v1458 = vrot.slane %v1457, 1
  %v1459 = vmax.f32 %v1457, %v1458
  %v1460 = vsel %vm1259, %v1363, -inf
  %v1461 = vmax.f32 %v1362, %v1460
  %v1462 = vrot.slane %v1461, 4
  %v1463 = vmax.f32 %v1461, %v1462
  %v1464 = vrot.slane %v1463, 2
  %v1465 = vmax.f32 %v1463, %v1464
  %v1466 = vrot.slane %v1465, 1
  %v1467 = vmax.f32 %v1465, %v1466
  %v1468 = vsel %vm1259, %v1365, -inf
  %v1469 = vmax.f32 %v1364, %v1468
  %v1470 = vrot.slane %v1469, 4
  %v1471 = vmax.f32 %v1469, %v1470
  %v1472 = vrot.slane %v1471, 2
  %v1473 = vmax.f32 %v1471, %v1472
  %v1474 = vrot.slane %v1473, 1
  %v1475 = vmax.f32 %v1473, %v1474
  %v1476 = vsel %vm1259, %v1367, -inf
  %v1477 = vmax.f32 %v1366, %v1476
  %v1478 = vrot.slane %v1477, 4
  %v1479 = vmax.f32 %v1477, %v1478
  %v1480 = vrot.slane %v1479, 2
  %v1481 = vmax.f32 %v1479, %v1480
  %v1482 = vrot.slane %v1481, 1
  %v1483 = vmax.f32 %v1481, %v1482
  %v1484 = vsel %vm1259, %v1369, -inf
  %v1485 = vmax.f32 %v1368, %v1484
  %v1486 = vrot.slane %v1485, 4
  %v1487 = vmax.f32 %v1485, %v1486
  %v1488 = vrot.slane %v1487, 2
  %v1489 = vmax.f32 %v1487, %v1488
  %v1490 = vrot.slane %v1489, 1
  %v1491 = vmax.f32 %v1489, %v1490
  %v1492 = vsel %vm1259, %v1371, -inf
  %v1493 = vmax.f32 %v1370, %v1492
  %v1494 = vrot.slane %v1493, 4
  %v1495 = vmax.f32 %v1493, %v1494
  %v1496 = vrot.slane %v1495, 2
  %v1497 = vmax.f32 %v1495, %v1496
  %v1498 = vrot.slane %v1497, 1
  %v1499 = vmax.f32 %v1497, %v1498
  %v1532 = vrot.slane %v524, 1
  %v1533 = vrot.slane %v528, 1
  %v1534 = vsel %vm1259, %v1532, %v1533
  %v1535 = vrot.slane %v534, 1
  %v1536 = vrot.slane %v538, 1
  %v1537 = vsel %vm1259, %v1535, %v1536
  %v1538 = vrot.slane %v544, 1
  %v1539 = vrot.slane %v548, 1
  %v1540 = vsel %vm1259, %v1538, %v1539
  %v1541 = vrot.slane %v554, 1
  %v1542 = vrot.slane %v558, 1
  %v1543 = vsel %vm1259, %v1541, %v1542
  %v1544 = vrot.slane %v564, 1
  %v1545 = vrot.slane %v568, 1
  %v1546 = vsel %vm1259, %v1544, %v1545
  %v1547 = vrot.slane %v574, 1
  %v1548 = vrot.slane %v578, 1
  %v1549 = vsel %vm1259, %v1547, %v1548
  %v1550 = vrot.slane %v584, 1
  %v1551 = vrot.slane %v588, 1
  %v1552 = vsel %vm1259, %v1550, %v1551
  %v1553 = vrot.slane %v594, 1
  %v1554 = vrot.slane %v598, 1
  %v1555 = vsel %vm1259, %v1553, %v1554
  %v1556 = vrot.slane %v604, 1
  %v1557 = vrot.slane %v608, 1
  %v1558 = vsel %vm1259, %v1556, %v1557
  %v1559 = vrot.slane %v614, 1
  %v1560 = vrot.slane %v618, 1
  %v1561 = vsel %vm1259, %v1559, %v1560
  %v1562 = vrot.slane %v624, 1
  %v1563 = vrot.slane %v628, 1
  %v1564 = vsel %vm1259, %v1562, %v1563
  %v1565 = vrot.slane %v634, 1
  %v1566 = vrot.slane %v638, 1
  %v1567 = vsel %vm1259, %v1565, %v1566
  %v1568 = vrot.slane %v644, 1
  %v1569 = vrot.slane %v648, 1
  %v1570 = vsel %vm1259, %v1568, %v1569
  %v1571 = vrot.slane %v654, 1
  %v1572 = vrot.slane %v658, 1
  %v1573 = vsel %vm1259, %v1571, %v1572
  %v1574 = vrot.slane %v664, 1
  %v1575 = vrot.slane %v668, 1
  %v1576 = vsel %vm1259, %v1574, %v1575
  %v1577 = vrot.slane %v674, 1
  %v1578 = vrot.slane %v678, 1
  %v1579 = vsel %vm1259, %v1577, %v1578
  %v1612 = vadd.f32 %v522, %v1534
  %v1613 = vadd.f32 %v526, %v1533
  %v1614 = vadd.f32 %v532, %v1537
  %v1615 = vadd.f32 %v536, %v1536
  %v1616 = vadd.f32 %v542, %v1540
  %v1617 = vadd.f32 %v546, %v1539
  %v1618 = vadd.f32 %v552, %v1543
  %v1619 = vadd.f32 %v556, %v1542
  %v1620 = vadd.f32 %v562, %v1546
  %v1621 = vadd.f32 %v566, %v1545
  %v1622 = vadd.f32 %v572, %v1549
  %v1623 = vadd.f32 %v576, %v1548
  %v1624 = vadd.f32 %v582, %v1552
  %v1625 = vadd.f32 %v586, %v1551
  %v1626 = vadd.f32 %v592, %v1555
  %v1627 = vadd.f32 %v596, %v1554
  %v1628 = vadd.f32 %v602, %v1558
  %v1629 = vadd.f32 %v606, %v1557
  %v1630 = vadd.f32 %v612, %v1561
  %v1631 = vadd.f32 %v616, %v1560
  %v1632 = vadd.f32 %v622, %v1564
  %v1633 = vadd.f32 %v626, %v1563
  %v1634 = vadd.f32 %v632, %v1567
  %v1635 = vadd.f32 %v636, %v1566
  %v1636 = vadd.f32 %v642, %v1570
  %v1637 = vadd.f32 %v646, %v1569
  %v1638 = vadd.f32 %v652, %v1573
  %v1639 = vadd.f32 %v656, %v1572
  %v1640 = vadd.f32 %v662, %v1576
  %v1641 = vadd.f32 %v666, %v1575
  %v1642 = vadd.f32 %v672, %v1579
  %v1643 = vadd.f32 %v676, %v1578
  %vm1676 = vcmask 1045504
  %v1677 = vrot.slane %v715, 2
  %v1678 = vrot.slane %v719, 2
  %v1679 = vsel %vm1676, %v1677, %v1678
  %v1680 = vrot.slane %v725, 2
  %v1681 = vrot.slane %v729, 2
  %v1682 = vsel %vm1676, %v1680, %v1681
  %v1683 = vrot.slane %v735, 2
  %v1684 = vrot.slane %v739, 2
  %v1685 = vsel %vm1676, %v1683, %v1684
  %v1686 = vrot.slane %v745, 2
  %v1687 = vrot.slane %v749, 2
  %v1688 = vsel %vm1676, %v1686, %v1687
  %v1689 = vrot.slane %v755, 2
  %v1690 = vrot.slane %v759, 2
  %v1691 = vsel %vm1676, %v1689, %v1690
  %v1692 = vrot.slane %v765, 2
  %v1693 = vrot.slane %v769, 2
  %v1694 = vsel %vm1676, %v1692, %v1693
  %v1695 = vrot.slane %v775, 2
  %v1696 = vrot.slane %v779, 2
  %v1697 = vsel %vm1676, %v1695, %v1696
  %v1698 = vrot.slane %v785, 2
  %v1699 = vrot.slane %v789, 2
  %v1700 = vsel %vm1676, %v1698, %v1699
  %v1701 = vrot.slane %v795, 2
  %v1702 = vrot.slane %v799, 2
  %v1703 = vsel %vm1676, %v1701, %v1702
  %v1704 = vrot.slane %v805, 2
  %v1705 = vrot.slane %v809, 2
  %v1706 = vsel %vm1676, %v1704, %v1705
  %v1707 = vrot.slane %v815, 2
  %v1708 = vrot.slane %v819, 2
  %v1709 = vsel %vm1676, %v1707, %v1708
  %v1710 = vrot.slane %v825, 2
  %v1711 = vrot.slane %v829, 2
  %v1712 = vsel %vm1676, %v1710, %v1711
  %v1713 = vrot.slane %v835, 2
  %v1714 = vrot.slane %v839, 2
  %v1715 = vsel %vm1676, %v1713, %v1714
  %v1716 = vrot.slane %v845, 2
  %v1717 = vrot.slane %v849, 2
  %v1718 = vsel %vm1676, %v1716, %v1717
  %v1719 = vrot.slane %v855, 2
  %v1720 = vrot.slane %v859, 2
  %v1721 = vsel %vm1676, %v1719, %v1720
  %v1722 = vrot.slane %v865, 2
  %v1723 = vrot.slane %v869, 2
  %v1724 = vsel %vm1676, %v1722, %v1723
  %v1757 = vadd.f32 %v1612, %v1679
  %v1758 = vadd.f32 %v1613, %v1678
  %v1759 = vadd.f32 %v1614, %v1682
  %v1760 = vadd.f32 %v1615, %v1681
  %v1761 = vadd.f32 %v1616, %v1685
  %v1762 = vadd.f32 %v1617, %v1684
  %v1763 = vadd.f32 %v1618, %v1688
  %v1764 = vadd.f32 %v1619, %v1687
  %v1765 = vadd.f32 %v1620, %v1691
  %v1766 = vadd.f32 %v1621, %v1690
  %v1767 = vadd.f32 %v1622, %v1694
  %v1768 = vadd.f32 %v1623, %v1693
  %v1769 = vadd.f32 %v1624, %v1697
  %v1770 = vadd.f32 %v1625, %v1696
  %v1771 = vadd.f32 %v1626, %v1700
  %v1772 = vadd.f32 %v1627, %v1699
  %v1773 = vadd.f32 %v1628, %v1703
  %v1774 = vadd.f32 %v1629, %v1702
  %v1775 = vadd.f32 %v1630, %v1706
  %v1776 = vadd.f32 %v1631, %v1705
  %v1777 = vadd.f32 %v1632, %v1709
  %v1778 = vadd.f32 %v1633, %v1708
  %v1779 = vadd.f32 %v1634, %v1712
  %v1780 = vadd.f32 %v1635, %v1711
  %v1781 = vadd.f32 %v1636, %v1715
  %v1782 = vadd.f32 %v1637, %v1714
  %v1783 = vadd.f32 %v1638, %v1718
  %v1784 = vadd.f32 %v1639, %v1717
  %v1785 = vadd.f32 %v1640, %v1721
  %v1786 = vadd.f32 %v1641, %v1720
  %v1787 = vadd.f32 %v1642, %v1724
  %v1788 = vadd.f32 %v1643, %v1723
  %v1789 = vsel %vm1676, %v1758, -inf
  %v1790 = vmax.f32 %v1757, %v1789
  %v1791 = vrot.slane %v1790, 4
  %v1792 = vmax.f32 %v1790, %v1791
  %v1793 = vrot.slane %v1792, 2
  %v1794 = vmax.f32 %v1792, %v1793
  %v1795 = vrot.slane %v1794, 1
  %v1796 = vmax.f32 %v1794, %v1795
  %v1797 = vsel %vm1676, %v1760, -inf
  %v1798 = vmax.f32 %v1759, %v1797
  %v1799 = vrot.slane %v1798, 4
  %v1800 = vmax.f32 %v1798, %v1799
  %v1801 = vrot.slane %v1800, 2
  %v1802 = vmax.f32 %v1800, %v1801
  %v1803 = vrot.slane %v1802, 1
  %v1804 = vmax.f32 %v1802, %v1803
  %v1805 = vsel %vm1676, %v1762, -inf
  %v1806 = vmax.f32 %v1761, %v1805
  %v1807 = vrot.slane %v1806, 4
  %v1808 = vmax.f32 %v1806, %v1807
  %v1809 = vrot.slane %v1808, 2
  %v1810 = vmax.f32 %v1808, %v1809
  %v1811 = vrot.slane %v1810, 1
  %v1812 = vmax.f32 %v1810, %v1811
  %v1813 = vsel %vm1676, %v1764, -inf
  %v1814 = vmax.f32 %v1763, %v1813
  %v1815 = vrot.slane %v1814, 4
  %v1816 = vmax.f32 %v1814, %v1815
  %v1817 = vrot.slane %v1816, 2
  %v1818 = vmax.f32 %v1816, %v1817
  %v1819 = vrot.slane %v1818, 1
  %v1820 = vmax.f32 %v1818, %v1819
  %v1821 = vsel %vm1676, %v1766, -inf
  %v1822 = vmax.f32 %v1765, %v1821
  %v1823 = vrot.slane %v1822, 4
  %v1824 = vmax.f32 %v1822, %v1823
  %v1825 = vrot.slane %v1824, 2
  %v1826 = vmax.f32 %v1824, %v1825
  %v1827 = vrot.slane %v1826, 1
  %v1828 = vmax.f32 %v1826, %v1827
  %v1829 = vsel %vm1676, %v1768, -inf
  %v1830 = vmax.f32 %v1767, %v1829
  %v1831 = vrot.slane %v1830, 4
  %v1832 = vmax.f32 %v1830, %v1831
  %v1833 = vrot.slane %v1832, 2
  %v1834 = vmax.f32 %v1832, %v1833
  %v1835 = vrot.slane %v1834, 1
  %v1836 = vmax.f32 %v1834, %v1835
  %v1837 = vsel %vm1676, %v1770, -inf
  %v1838 = vmax.f32 %v1769, %v1837
  %v1839 = vrot.slane %v1838, 4
  %v1840 = vmax.f32 %v1838, %v1839
  %v1841 = vrot.slane %v1840, 2
  %v1842 = vmax.f32 %v1840, %v1841
  %v1843 = vrot.slane %v1842, 1
  %v1844 = vmax.f32 %v1842, %v1843
  %v1845 = vsel %vm1676, %v1772, -inf
  %v1846 = vmax.f32 %v1771, %v1845
  %v1847 = vrot.slane %v1846, 4
  %v1848 = vmax.f32 %v1846, %v1847
  %v1849 = vrot.slane %v1848, 2
  %v1850 = vmax.f32 %v1848, %v1849
  %v1851 = vrot.slane %v1850, 1
  %v1852 = vmax.f32 %v1850, %v1851
  %v1853 = vsel %vm1676, %v1774, -inf
  %v1854 = vmax.f32 %v1773, %v1853
  %v1855 = vrot.slane %v1854, 4
  %v1856 = vmax.f32 %v1854, %v1855
  %v1857 = vrot.slane %v1856, 2
  %v1858 = vmax.f32 %v1856, %v1857
  %v1859 = vrot.slane %v1858, 1
  %v1860 = vmax.f32 %v1858, %v1859
  %v1861 = vsel %vm1676, %v1776, -inf
  %v1862 = vmax.f32 %v1775, %v1861
  %v1863 = vrot.slane %v1862, 4
  %v1864 = vmax.f32 %v1862, %v1863
  %v1865 = vrot.slane %v1864, 2
  %v1866 = vmax.f32 %v1864, %v1865
  %v1867 = vrot.slane %v1866, 1
  %v1868 = vmax.f32 %v1866, %v1867
  %v1869 = vsel %vm1676, %v1778, -inf
  %v1870 = vmax.f32 %v1777, %v1869
  %v1871 = vrot.slane %v1870, 4
  %v1872 = vmax.f32 %v1870, %v1871
  %v1873 = vrot.slane %v1872, 2
  %v1874 = vmax.f32 %v1872, %v1873
  %v1875 = vrot.slane %v1874, 1
  %v1876 = vmax.f32 %v1874, %v1875
  %v1877 = vsel %vm1676, %v1780, -inf
  %v1878 = vmax.f32 %v1779, %v1877
  %v1879 = vrot.slane %v1878, 4
  %v1880 = vmax.f32 %v1878, %v1879
  %v1881 = vrot.slane %v1880, 2
  %v1882 = vmax.f32 %v1880, %v1881
  %v1883 = vrot.slane %v1882, 1
  %v1884 = vmax.f32 %v1882, %v1883
  %v1885 = vsel %vm1676, %v1782, -inf
  %v1886 = vmax.f32 %v1781, %v1885
  %v1887 = vrot.slane %v1886, 4
  %v1888 = vmax.f32 %v1886, %v1887
  %v1889 = vrot.slane %v1888, 2
  %v1890 = vmax.f32 %v1888, %v1889
  %v1891 = vrot.slane %v1890, 1
  %v1892 = vmax.f32 %v1890, %v1891
  %v1893 = vsel %vm1676, %v1784, -inf
  %v1894 = vmax.f32 %v1783, %v1893
  %v1895 = vrot.slane %v1894, 4
  %v1896 = vmax.f32 %v1894, %v1895
  %v1897 = vrot.slane %v1896, 2
  %v1898 = vmax.f32 %v1896, %v1897
  %v1899 = vrot.slane %v1898, 1
  %v1900 = vmax.f32 %v1898, %v1899
  %v1901 = vsel %vm1676, %v1786, -inf
  %v1902 = vmax.f32 %v1785, %v1901
  %v1903 = vrot.slane %v1902, 4
  %v1904 = vmax.f32 %v1902, %v1903
  %v1905 = vrot.slane %v1904, 2
  %v1906 = vmax.f32 %v1904, %v1905
  %v1907 = vrot.slane %v1906, 1
  %v1908 = vmax.f32 %v1906, %v1907
  %v1909 = vsel %vm1676, %v1788, -inf
  %v1910 = vmax.f32 %v1787, %v1909
  %v1911 = vrot.slane %v1910, 4
  %v1912 = vmax.f32 %v1910, %v1911
  %v1913 = vrot.slane %v1912, 2
  %v1914 = vmax.f32 %v1912, %v1913
  %v1915 = vrot.slane %v1914, 1
  %v1916 = vmax.f32 %v1914, %v1915
  %v1949 = vrot.slane %v908, 1
  %v1950 = vrot.slane %v912, 1
  %v1951 = vsel %vm1259, %v1949, %v1950
  %v1952 = vrot.slane %v918, 1
  %v1953 = vrot.slane %v922, 1
  %v1954 = vsel %vm1259, %v1952, %v1953
  %v1955 = vrot.slane %v928, 1
  %v1956 = vrot.slane %v932, 1
  %v1957 = vsel %vm1259, %v1955, %v1956
  %v1958 = vrot.slane %v938, 1
  %v1959 = vrot.slane %v942, 1
  %v1960 = vsel %vm1259, %v1958, %v1959
  %v1961 = vrot.slane %v948, 1
  %v1962 = vrot.slane %v952, 1
  %v1963 = vsel %vm1259, %v1961, %v1962
  %v1964 = vrot.slane %v958, 1
  %v1965 = vrot.slane %v962, 1
  %v1966 = vsel %vm1259, %v1964, %v1965
  %v1967 = vrot.slane %v968, 1
  %v1968 = vrot.slane %v972, 1
  %v1969 = vsel %vm1259, %v1967, %v1968
  %v1970 = vrot.slane %v978, 1
  %v1971 = vrot.slane %v982, 1
  %v1972 = vsel %vm1259, %v1970, %v1971
  %v1973 = vrot.slane %v988, 1
  %v1974 = vrot.slane %v992, 1
  %v1975 = vsel %vm1259, %v1973, %v1974
  %v1976 = vrot.slane %v998, 1
  %v1977 = vrot.slane %v1002, 1
  %v1978 = vsel %vm1259, %v1976, %v1977
  %v1979 = vrot.slane %v1008, 1
  %v1980 = vrot.slane %v1012, 1
  %v1981 = vsel %vm1259, %v1979, %v1980
  %v1982 = vrot.slane %v1018, 1
  %v1983 = vrot.slane %v1022, 1
  %v1984 = vsel %vm1259, %v1982, %v1983
  %v1985 = vrot.slane %v1028, 1
  %v1986 = vrot.slane %v1032, 1
  %v1987 = vsel %vm1259, %v1985, %v1986
  %v1988 = vrot.slane %v1038, 1
  %v1989 = vrot.slane %v1042, 1
  %v1990 = vsel %vm1259, %v1988, %v1989
  %v1991 = vrot.slane %v1048, 1
  %v1992 = vrot.slane %v1052, 1
  %v1993 = vsel %vm1259, %v1991, %v1992
  %v1994 = vrot.slane %v1058, 1
  %v1995 = vrot.slane %v1062, 1
  %v1996 = vsel %vm1259, %v1994, %v1995
  %v2029 = vadd.f32 %v717, %v1951
  %v2030 = vadd.f32 %v721, %v1950
  %v2031 = vadd.f32 %v727, %v1954
  %v2032 = vadd.f32 %v731, %v1953
  %v2033 = vadd.f32 %v737, %v1957
  %v2034 = vadd.f32 %v741, %v1956
  %v2035 = vadd.f32 %v747, %v1960
  %v2036 = vadd.f32 %v751, %v1959
  %v2037 = vadd.f32 %v757, %v1963
  %v2038 = vadd.f32 %v761, %v1962
  %v2039 = vadd.f32 %v767, %v1966
  %v2040 = vadd.f32 %v771, %v1965
  %v2041 = vadd.f32 %v777, %v1969
  %v2042 = vadd.f32 %v781, %v1968
  %v2043 = vadd.f32 %v787, %v1972
  %v2044 = vadd.f32 %v791, %v1971
  %v2045 = vadd.f32 %v797, %v1975
  %v2046 = vadd.f32 %v801, %v1974
  %v2047 = vadd.f32 %v807, %v1978
  %v2048 = vadd.f32 %v811, %v1977
  %v2049 = vadd.f32 %v817, %v1981
  %v2050 = vadd.f32 %v821, %v1980
  %v2051 = vadd.f32 %v827, %v1984
  %v2052 = vadd.f32 %v831, %v1983
  %v2053 = vadd.f32 %v837, %v1987
  %v2054 = vadd.f32 %v841, %v1986
  %v2055 = vadd.f32 %v847, %v1990
  %v2056 = vadd.f32 %v851, %v1989
  %v2057 = vadd.f32 %v857, %v1993
  %v2058 = vadd.f32 %v861, %v1992
  %v2059 = vadd.f32 %v867, %v1996
  %v2060 = vadd.f32 %v871, %v1995
  %v2093 = vrot.slane %v910, 2
  %v2094 = vrot.slane %v914, 2
  %v2095 = vsel %vm1676, %v2093, %v2094
  %v2096 = vrot.slane %v920, 2
  %v2097 = vrot.slane %v924, 2
  %v2098 = vsel %vm1676, %v2096, %v2097
  %v2099 = vrot.slane %v930, 2
  %v2100 = vrot.slane %v934, 2
  %v2101 = vsel %vm1676, %v2099, %v2100
  %v2102 = vrot.slane %v940, 2
  %v2103 = vrot.slane %v944, 2
  %v2104 = vsel %vm1676, %v2102, %v2103
  %v2105 = vrot.slane %v950, 2
  %v2106 = vrot.slane %v954, 2
  %v2107 = vsel %vm1676, %v2105, %v2106
  %v2108 = vrot.slane %v960, 2
  %v2109 = vrot.slane %v964, 2
  %v2110 = vsel %vm1676, %v2108, %v2109
  %v2111 = vrot.slane %v970, 2
  %v2112 = vrot.slane %v974, 2
  %v2113 = vsel %vm1676, %v2111, %v2112
  %v2114 = vrot.slane %v980, 2
  %v2115 = vrot.slane %v984, 2
  %v2116 = vsel %vm1676, %v2114, %v2115
  %v2117 = vrot.slane %v990, 2
  %v2118 = vrot.slane %v994, 2
  %v2119 = vsel %vm1676, %v2117, %v2118
  %v2120 = vrot.slane %v1000, 2
  %v2121 = vrot.slane %v1004, 2
  %v2122 = vsel %vm1676, %v2120, %v2121
  %v2123 = vrot.slane %v1010, 2
  %v2124 = vrot.slane %v1014, 2
  %v2125 = vsel %vm1676, %v2123, %v2124
  %v2126 = vrot.slane %v1020, 2
  %v2127 = vrot.slane %v1024, 2
  %v2128 = vsel %vm1676, %v2126, %v2127
  %v2129 = vrot.slane %v1030, 2
  %v2130 = vrot.slane %v1034, 2
  %v2131 = vsel %vm1676, %v2129, %v2130
  %v2132 = vrot.slane %v1040, 2
  %v2133 = vrot.slane %v1044, 2
  %v2134 = vsel %vm1676, %v2132, %v2133
  %v2135 = vrot.slane %v1050, 2
  %v2136 = vrot.slane %v1054, 2
  %v2137 = vsel %vm1676, %v2135, %v2136
  %v2138 = vrot.slane %v1060, 2
  %v2139 = vrot.slane %v1064, 2
  %v2140 = vsel %vm1676, %v2138, %v2139
  %v2173 = vadd.f32 %v2029, %v2095
  %v2174 = vadd.f32 %v2030, %v2094
  %v2175 = vadd.f32 %v2031, %v2098
  %v2176 = vadd.f32 %v2032, %v2097
  %v2177 = vadd.f32 %v2033, %v2101
  %v2178 = vadd.f32 %v2034, %v2100
  %v2179 = vadd.f32 %v2035, %v2104
  %v2180 = vadd.f32 %v2036, %v2103
  %v2181 = vadd.f32 %v2037, %v2107
  %v2182 = vadd.f32 %v2038, %v2106
  %v2183 = vadd.f32 %v2039, %v2110
  %v2184 = vadd.f32 %v2040, %v2109
  %v2185 = vadd.f32 %v2041, %v2113
  %v2186 = vadd.f32 %v2042, %v2112
  %v2187 = vadd.f32 %v2043, %v2116
  %v2188 = vadd.f32 %v2044, %v2115
  %v2189 = vadd.f32 %v2045, %v2119
  %v2190 = vadd.f32 %v2046, %v2118
  %v2191 = vadd.f32 %v2047, %v2122
  %v2192 = vadd.f32 %v2048, %v2121
  %v2193 = vadd.f32 %v2049, %v2125
  %v2194 = vadd.f32 %v2050, %v2124
  %v2195 = vadd.f32 %v2051, %v2128
  %v2196 = vadd.f32 %v2052, %v2127
  %v2197 = vadd.f32 %v2053, %v2131
  %v2198 = vadd.f32 %v2054, %v2130
  %v2199 = vadd.f32 %v2055, %v2134
  %v2200 = vadd.f32 %v2056, %v2133
  %v2201 = vadd.f32 %v2057, %v2137
  %v2202 = vadd.f32 %v2058, %v2136
  %v2203 = vadd.f32 %v2059, %v2140
  %v2204 = vadd.f32 %v2060, %v2139
  %vm2237 = vcmask 1044480
  %v2238 = vrot.slane %v1101, 3
  %v2239 = vrot.slane %v1104, 3
  %v2240 = vsel %vm2237, %v2238, %v2239
  %v2241 = vrot.slane %v1109, 3
  %v2242 = vrot.slane %v1112, 3
  %v2243 = vsel %vm2237, %v2241, %v2242
  %v2244 = vrot.slane %v1117, 3
  %v2245 = vrot.slane %v1120, 3
  %v2246 = vsel %vm2237, %v2244, %v2245
  %v2247 = vrot.slane %v1125, 3
  %v2248 = vrot.slane %v1128, 3
  %v2249 = vsel %vm2237, %v2247, %v2248
  %v2250 = vrot.slane %v1133, 3
  %v2251 = vrot.slane %v1136, 3
  %v2252 = vsel %vm2237, %v2250, %v2251
  %v2253 = vrot.slane %v1141, 3
  %v2254 = vrot.slane %v1144, 3
  %v2255 = vsel %vm2237, %v2253, %v2254
  %v2256 = vrot.slane %v1149, 3
  %v2257 = vrot.slane %v1152, 3
  %v2258 = vsel %vm2237, %v2256, %v2257
  %v2259 = vrot.slane %v1157, 3
  %v2260 = vrot.slane %v1160, 3
  %v2261 = vsel %vm2237, %v2259, %v2260
  %v2262 = vrot.slane %v1165, 3
  %v2263 = vrot.slane %v1168, 3
  %v2264 = vsel %vm2237, %v2262, %v2263
  %v2265 = vrot.slane %v1173, 3
  %v2266 = vrot.slane %v1176, 3
  %v2267 = vsel %vm2237, %v2265, %v2266
  %v2268 = vrot.slane %v1181, 3
  %v2269 = vrot.slane %v1184, 3
  %v2270 = vsel %vm2237, %v2268, %v2269
  %v2271 = vrot.slane %v1189, 3
  %v2272 = vrot.slane %v1192, 3
  %v2273 = vsel %vm2237, %v2271, %v2272
  %v2274 = vrot.slane %v1197, 3
  %v2275 = vrot.slane %v1200, 3
  %v2276 = vsel %vm2237, %v2274, %v2275
  %v2277 = vrot.slane %v1205, 3
  %v2278 = vrot.slane %v1208, 3
  %v2279 = vsel %vm2237, %v2277, %v2278
  %v2280 = vrot.slane %v1213, 3
  %v2281 = vrot.slane %v1216, 3
  %v2282 = vsel %vm2237, %v2280, %v2281
  %v2283 = vrot.slane %v1221, 3
  %v2284 = vrot.slane %v1224, 3
  %v2285 = vsel %vm2237, %v2283, %v2284
  %v2318 = vadd.f32 %v2173, %v2240
  %v2319 = vadd.f32 %v2174, %v2239
  %v2320 = vadd.f32 %v2175, %v2243
  %v2321 = vadd.f32 %v2176, %v2242
  %v2322 = vadd.f32 %v2177, %v2246
  %v2323 = vadd.f32 %v2178, %v2245
  %v2324 = vadd.f32 %v2179, %v2249
  %v2325 = vadd.f32 %v2180, %v2248
  %v2326 = vadd.f32 %v2181, %v2252
  %v2327 = vadd.f32 %v2182, %v2251
  %v2328 = vadd.f32 %v2183, %v2255
  %v2329 = vadd.f32 %v2184, %v2254
  %v2330 = vadd.f32 %v2185, %v2258
  %v2331 = vadd.f32 %v2186, %v2257
  %v2332 = vadd.f32 %v2187, %v2261
  %v2333 = vadd.f32 %v2188, %v2260
  %v2334 = vadd.f32 %v2189, %v2264
  %v2335 = vadd.f32 %v2190, %v2263
  %v2336 = vadd.f32 %v2191, %v2267
  %v2337 = vadd.f32 %v2192, %v2266
  %v2338 = vadd.f32 %v2193, %v2270
  %v2339 = vadd.f32 %v2194, %v2269
  %v2340 = vadd.f32 %v2195, %v2273
  %v2341 = vadd.f32 %v2196, %v2272
  %v2342 = vadd.f32 %v2197, %v2276
  %v2343 = vadd.f32 %v2198, %v2275
  %v2344 = vadd.f32 %v2199, %v2279
  %v2345 = vadd.f32 %v2200, %v2278
  %v2346 = vadd.f32 %v2201, %v2282
  %v2347 = vadd.f32 %v2202, %v2281
  %v2348 = vadd.f32 %v2203, %v2285
  %v2349 = vadd.f32 %v2204, %v2284
  %v2350 = vsel %vm2237, %v2319, -inf
  %v2351 = vmax.f32 %v2318, %v2350
  %v2352 = vrot.slane %v2351, 4
  %v2353 = vmax.f32 %v2351, %v2352
  %v2354 = vrot.slane %v2353, 2
  %v2355 = vmax.f32 %v2353, %v2354
  %v2356 = vrot.slane %v2355, 1
  %v2357 = vmax.f32 %v2355, %v2356
  %v2358 = vsel %vm2237, %v2321, -inf
  %v2359 = vmax.f32 %v2320, %v2358
  %v2360 = vrot.slane %v2359, 4
  %v2361 = vmax.f32 %v2359, %v2360
  %v2362 = vrot.slane %v2361, 2
  %v2363 = vmax.f32 %v2361, %v2362
  %v2364 = vrot.slane %v2363, 1
  %v2365 = vmax.f32 %v2363, %v2364
  %v2366 = vsel %vm2237, %v2323, -inf
  %v2367 = vmax.f32 %v2322, %v2366
  %v2368 = vrot.slane %v2367, 4
  %v2369 = vmax.f32 %v2367, %v2368
  %v2370 = vrot.slane %v2369, 2
  %v2371 = vmax.f32 %v2369, %v2370
  %v2372 = vrot.slane %v2371, 1
  %v2373 = vmax.f32 %v2371, %v2372
  %v2374 = vsel %vm2237, %v2325, -inf
  %v2375 = vmax.f32 %v2324, %v2374
  %v2376 = vrot.slane %v2375, 4
  %v2377 = vmax.f32 %v2375, %v2376
  %v2378 = vrot.slane %v2377, 2
  %v2379 = vmax.f32 %v2377, %v2378
  %v2380 = vrot.slane %v2379, 1
  %v2381 = vmax.f32 %v2379, %v2380
  %v2382 = vsel %vm2237, %v2327, -inf
  %v2383 = vmax.f32 %v2326, %v2382
  %v2384 = vrot.slane %v2383, 4
  %v2385 = vmax.f32 %v2383, %v2384
  %v2386 = vrot.slane %v2385, 2
  %v2387 = vmax.f32 %v2385, %v2386
  %v2388 = vrot.slane %v2387, 1
  %v2389 = vmax.f32 %v2387, %v2388
  %v2390 = vsel %vm2237, %v2329, -inf
  %v2391 = vmax.f32 %v2328, %v2390
  %v2392 = vrot.slane %v2391, 4
  %v2393 = vmax.f32 %v2391, %v2392
  %v2394 = vrot.slane %v2393, 2
  %v2395 = vmax.f32 %v2393, %v2394
  %v2396 = vrot.slane %v2395, 1
  %v2397 = vmax.f32 %v2395, %v2396
  %v2398 = vsel %vm2237, %v2331, -inf
  %v2399 = vmax.f32 %v2330, %v2398
  %v2400 = vrot.slane %v2399, 4
  %v2401 = vmax.f32 %v2399, %v2400
  %v2402 = vrot.slane %v2401, 2
  %v2403 = vmax.f32 %v2401, %v2402
  %v2404 = vrot.slane %v2403, 1
  %v2405 = vmax.f32 %v2403, %v2404
  %v2406 = vsel %vm2237, %v2333, -inf
  %v2407 = vmax.f32 %v2332, %v2406
  %v2408 = vrot.slane %v2407, 4
  %v2409 = vmax.f32 %v2407, %v2408
  %v2410 = vrot.slane %v2409, 2
  %v2411 = vmax.f32 %v2409, %v2410
  %v2412 = vrot.slane %v2411, 1
  %v2413 = vmax.f32 %v2411, %v2412
  %v2414 = vsel %vm2237, %v2335, -inf
  %v2415 = vmax.f32 %v2334, %v2414
  %v2416 = vrot.slane %v2415, 4
  %v2417 = vmax.f32 %v2415, %v2416
  %v2418 = vrot.slane %v2417, 2
  %v2419 = vmax.f32 %v2417, %v2418
  %v2420 = vrot.slane %v2419, 1
  %v2421 = vmax.f32 %v2419, %v2420
  %v2422 = vsel %vm2237, %v2337, -inf
  %v2423 = vmax.f32 %v2336, %v2422
  %v2424 = vrot.slane %v2423, 4
  %v2425 = vmax.f32 %v2423, %v2424
  %v2426 = vrot.slane %v2425, 2
  %v2427 = vmax.f32 %v2425, %v2426
  %v2428 = vrot.slane %v2427, 1
  %v2429 = vmax.f32 %v2427, %v2428
  %v2430 = vsel %vm2237, %v2339, -inf
  %v2431 = vmax.f32 %v2338, %v2430
  %v2432 = vrot.slane %v2431, 4
  %v2433 = vmax.f32 %v2431, %v2432
  %v2434 = vrot.slane %v2433, 2
  %v2435 = vmax.f32 %v2433, %v2434
  %v2436 = vrot.slane %v2435, 1
  %v2437 = vmax.f32 %v2435, %v2436
  %v2438 = vsel %vm2237, %v2341, -inf
  %v2439 = vmax.f32 %v2340, %v2438
  %v2440 = vrot.slane %v2439, 4
  %v2441 = vmax.f32 %v2439, %v2440
  %v2442 = vrot.slane %v2441, 2
  %v2443 = vmax.f32 %v2441, %v2442
  %v2444 = vrot.slane %v2443, 1
  %v2445 = vmax.f32 %v2443, %v2444
  %v2446 = vsel %vm2237, %v2343, -inf
  %v2447 = vmax.f32 %v2342, %v2446
  %v2448 = vrot.slane %v2447, 4
  %v2449 = vmax.f32 %v2447, %v2448
  %v2450 = vrot.slane %v2449, 2
  %v2451 = vmax.f32 %v2449, %v2450
  %v2452 = vrot.slane %v2451, 1
  %v2453 = vmax.f32 %v2451, %v2452
  %v2454 = vsel %vm2237, %v2345, -inf
  %v2455 = vmax.f32 %v2344, %v2454
  %v2456 = vrot.slane %v2455, 4
  %v2457 = vmax.f32 %v2455, %v2456
  %v2458 = vrot.slane %v2457, 2
  %v2459 = vmax.f32 %v2457, %v2458
  %v2460 = vrot.slane %v2459, 1
  %v2461 = vmax.f32 %v2459, %v2460
  %v2462 = vsel %vm2237, %v2347, -inf
  %v2463 = vmax.f32 %v2346, %v2462
  %v2464 = vrot.slane %v2463, 4
  %v2465 = vmax.f32 %v2463, %v2464
  %v2466 = vrot.slane %v2465, 2
  %v2467 = vmax.f32 %v2465, %v2466
  %v2468 = vrot.slane %v2467, 1
  %v2469 = vmax.f32 %v2467, %v2468
  %v2470 = vsel %vm2237, %v2349, -inf
  %v2471 = vmax.f32 %v2348, %v2470
  %v2472 = vrot.slane %v2471, 4
  %v2473 = vmax.f32 %v2471, %v2472
  %v2474 = vrot.slane %v2473, 2
  %v2475 = vmax.f32 %v2473, %v2474
  %v2476 = vrot.slane %v2475, 1
  %v2477 = vmax.f32 %v2475, %v2476
  %vm2494 = vcmask 1041409
  %v2495 = vsel %vm2494, %v1387, %v1379
  %vm2496 = vcmask 1042434
  %v2497 = vsel %vm2496, %v1395, %v2495
  %vm2498 = vcmask 1043459
  %v2499 = vsel %vm2498, %v1403, %v2497
  %vm2500 = vcmask 1044484
  %v2501 = vsel %vm2500, %v1411, %v2499
  %vm2502 = vcmask 1045509
  %v2503 = vsel %vm2502, %v1419, %v2501
  %vm2504 = vcmask 1046534
  %v2505 = vsel %vm2504, %v1427, %v2503
  %vm2506 = vcmask 1047559
  %v2507 = vsel %vm2506, %v1435, %v2505
  %v2508 = vsel %vm2494, %v1451, %v1443
  %v2509 = vsel %vm2496, %v1459, %v2508
  %v2510 = vsel %vm2498, %v1467, %v2509
  %v2511 = vsel %vm2500, %v1475, %v2510
  %v2512 = vsel %vm2502, %v1483, %v2511
  %v2513 = vsel %vm2504, %v1491, %v2512
  %v2514 = vsel %vm2506, %v1499, %v2513
  %v2533 = vsel %vm2494, %v1804, %v1796
  %v2534 = vsel %vm2496, %v1812, %v2533
  %v2535 = vsel %vm2498, %v1820, %v2534
  %v2536 = vsel %vm2500, %v1828, %v2535
  %v2537 = vsel %vm2502, %v1836, %v2536
  %v2538 = vsel %vm2504, %v1844, %v2537
  %v2539 = vsel %vm2506, %v1852, %v2538
  %v2540 = vsel %vm2494, %v1868, %v1860
  %v2541 = vsel %vm2496, %v1876, %v2540
  %v2542 = vsel %vm2498, %v1884, %v2541
  %v2543 = vsel %vm2500, %v1892, %v2542
  %v2544 = vsel %vm2502, %v1900, %v2543
  %v2545 = vsel %vm2504, %v1908, %v2544
  %v2546 = vsel %vm2506, %v1916, %v2545
  %v2565 = vsel %vm2494, %v2365, %v2357
  %v2566 = vsel %vm2496, %v2373, %v2565
  %v2567 = vsel %vm2498, %v2381, %v2566
  %v2568 = vsel %vm2500, %v2389, %v2567
  %v2569 = vsel %vm2502, %v2397, %v2568
  %v2570 = vsel %vm2504, %v2405, %v2569
  %v2571 = vsel %vm2506, %v2413, %v2570
  %v2572 = vsel %vm2494, %v2429, %v2421
  %v2573 = vsel %vm2496, %v2437, %v2572
  %v2574 = vsel %vm2498, %v2445, %v2573
  %v2575 = vsel %vm2500, %v2453, %v2574
  %v2576 = vsel %vm2502, %v2461, %v2575
  %v2577 = vsel %vm2504, %v2469, %v2576
  %v2578 = vsel %vm2506, %v2477, %v2577
  %v2581 = vld [vmem:[%s2] sm:$0x7]
  %v2583 = vlaneseq
  %v2584 = vshrl.u32 %v2583, 7
  %v2585 = vsub.s32 0, %v2584
  %v2586 = vrot.slane %v2581, %v2585
  %v2587 = vlaneseq
  %v2588 = vshrl.u32 %v2587, 7
  %v2589 = vsub.s32 1, %v2588
  %v2590 = vrot.slane %v2581, %v2589
  %v2591 = vlaneseq
  %v2592 = vshrl.u32 %v2591, 7
  %v2593 = vsub.s32 2, %v2592
  %v2594 = vrot.slane %v2581, %v2593
  %v2598 = vadd.f32 %v2507, %v2586
  %v2599 = vadd.f32 %v2539, %v2590
  %v2600 = vadd.f32 %v2571, %v2594
  %v2601 = vadd.f32 %v2514, %v2586
  %v2602 = vadd.f32 %v2546, %v2590
  %v2603 = vadd.f32 %v2578, %v2594
  %v2604 = vmax.f32 %v2598, 0.0
  %v2605 = vmax.f32 %v2599, 0.0
  %v2606 = vmax.f32 %v2600, 0.0
  %v2607 = vmax.f32 %v2601, 0.0
  %v2608 = vmax.f32 %v2602, 0.0
  %v2609 = vmax.f32 %v2603, 0.0
  %v2610 = vld [vmem:[%s3] sm:$0xff]
  %v2611 = vld [vmem:[%s3 + $0x8] sm:$0xff]
  %v2612 = vld [vmem:[%s3 + $0x10] sm:$0xff]
  %v2613 = vld [vmem:[%s3 + $0x18] sm:$0xff]
  %v2614 = vld [vmem:[%s3 + $0x20] sm:$0xff]
  %v2615 = vld [vmem:[%s3 + $0x28] sm:$0xff]
  %v2616 = vld [vmem:[%s3 + $0x30] sm:$0xff]
  %v2617 = vld [vmem:[%s3 + $0x38] sm:$0xff]
  %v2618 = vld [vmem:[%s3 + $0x40] sm:$0xff]
  %v2619 = vld [vmem:[%s3 + $0x48] sm:$0xff]
  %v2620 = vld [vmem:[%s3 + $0x50] sm:$0xff]
  %v2621 = vld [vmem:[%s3 + $0x58] sm:$0xff]
  %v2622 = vld [vmem:[%s3 + $0x60] sm:$0xff]
  %v2623 = vld [vmem:[%s3 + $0x68] sm:$0xff]
  %v2624 = vld [vmem:[%s3 + $0x70] sm:$0xff]
  %v2625 = vld [vmem:[%s3 + $0x78] sm:$0xff]
  %v2626 = vld [vmem:[%s3 + $0x80] sm:$0xff]
  %v2627 = vld [vmem:[%s3 + $0x88] sm:$0xff]
  %v2628 = vld [vmem:[%s3 + $0x90] sm:$0xff]
  %v2629 = vld [vmem:[%s3 + $0x98] sm:$0xff]
  %v2630 = vld [vmem:[%s3 + $0xa0] sm:$0xff]
  %v2631 = vld [vmem:[%s3 + $0xa8] sm:$0xff]
  %v2632 = vld [vmem:[%s3 + $0xb0] sm:$0xff]
  %v2633 = vld [vmem:[%s3 + $0xb8] sm:$0xff]
  %v2634 = vld [vmem:[%s3 + $0xc0] sm:$0xff]
  %v2635 = vld [vmem:[%s3 + $0xc8] sm:$0xff]
  %v2636 = vld [vmem:[%s3 + $0xd0] sm:$0xff]
  %v2637 = vld [vmem:[%s3 + $0xd8] sm:$0xff]
  %v2638 = vld [vmem:[%s3 + $0xe0] sm:$0xff]
  %v2639 = vld [vmem:[%s3 + $0xe8] sm:$0xff]
  %v2640 = vld [vmem:[%s3 + $0xf0] sm:$0xff]
  %v2641 = vld [vmem:[%s3 + $0xf8] sm:$0xff]
  %v2642 = vld [vmem:[%s3 + $0x100] sm:$0xff]
  %v2643 = vld [vmem:[%s3 + $0x108] sm:$0xff]
  %v2644 = vld [vmem:[%s3 + $0x110] sm:$0xff]
  %v2645 = vld [vmem:[%s3 + $0x118] sm:$0xff]
  %v2646 = vld [vmem:[%s3 + $0x120] sm:$0xff]
  %v2647 = vld [vmem:[%s3 + $0x128] sm:$0xff]
  %v2648 = vld [vmem:[%s3 + $0x130] sm:$0xff]
  %v2649 = vld [vmem:[%s3 + $0x138] sm:$0xff]
  %v2650 = vld [vmem:[%s3 + $0x140] sm:$0xff]
  %v2651 = vld [vmem:[%s3 + $0x148] sm:$0xff]
  %v2652 = vld [vmem:[%s3 + $0x150] sm:$0xff]
  %v2653 = vld [vmem:[%s3 + $0x158] sm:$0xff]
  %v2654 = vld [vmem:[%s3 + $0x160] sm:$0xff]
  %v2655 = vld [vmem:[%s3 + $0x168] sm:$0xff]
  %v2656 = vld [vmem:[%s3 + $0x170] sm:$0xff]
  %v2657 = vld [vmem:[%s3 + $0x178] sm:$0xff]
  %v2658 = vld [vmem:[%s4] sm:$0x1]
  %v2660 = vlaneseq
  %v2661 = vshrl.u32 %v2660, 7
  %v2662 = vsub.s32 0, %v2661
  %v2663 = vrot.slane %v2658, %v2662
  %2665 = vmatprep.subr.mxu0 0.0
  %2666 = vmatpush1.msra.mxu0 %v2610
  %2667 = vmatprep.subr.mxu0 0.0
  %2668 = vmatpush1.msra.mxu0 %v2611
  %2669 = vmatprep.subr.mxu0 0.0
  %2670 = vmatpush1.msra.mxu0 %v2612
  %2671 = vmatprep.subr.mxu0 0.0
  %2672 = vmatpush1.msra.mxu0 %v2613
  %2673 = vmatprep.subr.mxu0 0.0
  %2674 = vmatpush1.msra.mxu0 %v2614
  %2675 = vmatprep.subr.mxu0 0.0
  %2676 = vmatpush1.msra.mxu0 %v2615
  %2677 = vmatprep.subr.mxu0 0.0
  %2678 = vmatpush1.msra.mxu0 %v2616
  %2679 = vmatprep.subr.mxu0 0.0
  %2680 = vmatpush1.msra.mxu0 %v2617
  %2681 = vmatprep.subr.mxu0 0.0
  %2682 = vmatpush1.msra.mxu0 %v2618
  %2683 = vmatprep.subr.mxu0 0.0
  %2684 = vmatpush1.msra.mxu0 %v2619
  %2685 = vmatprep.subr.mxu0 0.0
  %2686 = vmatpush1.msra.mxu0 %v2620
  %2687 = vmatprep.subr.mxu0 0.0
  %2688 = vmatpush1.msra.mxu0 %v2621
  %2689 = vmatprep.subr.mxu0 0.0
  %2690 = vmatpush1.msra.mxu0 %v2622
  %2691 = vmatprep.subr.mxu0 0.0
  %2692 = vmatpush1.msra.mxu0 %v2623
  %2693 = vmatprep.subr.mxu0 0.0
  %2694 = vmatpush1.msra.mxu0 %v2624
  %2695 = vmatprep.subr.mxu0 0.0
  %2696 = vmatpush1.msra.mxu0 %v2625
  %2697 = vmatprep.subr.mxu0 0.0
  %2698 = vmatpush1.msra.mxu0 %v2626
  %2699 = vmatprep.subr.mxu0 0.0
  %2700 = vmatpush1.msra.mxu0 %v2627
  %2701 = vmatprep.subr.mxu0 0.0
  %2702 = vmatpush1.msra.mxu0 %v2628
  %2703 = vmatprep.subr.mxu0 0.0
  %2704 = vmatpush1.msra.mxu0 %v2629
  %2705 = vmatprep.subr.mxu0 0.0
  %2706 = vmatpush1.msra.mxu0 %v2630
  %2707 = vmatprep.subr.mxu0 0.0
  %2708 = vmatpush1.msra.mxu0 %v2631
  %2709 = vmatprep.subr.mxu0 0.0
  %2710 = vmatpush1.msra.mxu0 %v2632
  %2711 = vmatprep.subr.mxu0 0.0
  %2712 = vmatpush1.msra.mxu0 %v2633
  %2713 = vmatprep.subr.mxu0 0.0
  %2714 = vmatpush1.msra.mxu0 %v2634
  %2715 = vmatprep.subr.mxu0 0.0
  %2716 = vmatpush1.msra.mxu0 %v2635
  %2717 = vmatprep.subr.mxu0 0.0
  %2718 = vmatpush1.msra.mxu0 %v2636
  %2719 = vmatprep.subr.mxu0 0.0
  %2720 = vmatpush1.msra.mxu0 %v2637
  %2721 = vmatprep.subr.mxu0 0.0
  %2722 = vmatpush1.msra.mxu0 %v2638
  %2723 = vmatprep.subr.mxu0 0.0
  %2724 = vmatpush1.msra.mxu0 %v2639
  %2725 = vmatprep.subr.mxu0 0.0
  %2726 = vmatpush1.msra.mxu0 %v2640
  %2727 = vmatprep.subr.mxu0 0.0
  %2728 = vmatpush1.msra.mxu0 %v2641
  %2729 = vmatprep.mubr.f32.mxu0 %v2605
  %2730 = vmatmul.mubr.f32.gmra.mrb[0].mxu0 %v2604
  %v2731 = vpop.f32.mrb[0].mxu0
  %v2732 = vadd.f32 %v2663, %v2731
  %v2733 = vpop.f32.mrb[0].mxu0
  %2734 = vmatprep.mubr.f32.mxu0 %v2608
  %2735 = vmatmul.mubr.f32.gmra.mrb[0].mxu0 %v2607
  %v2736 = vpop.f32.mrb[0].mxu0
  %v2737 = vadd.f32 %v2663, %v2736
  %v2738 = vpop.f32.mrb[0].mxu0
  %2739 = vdwg.mxu0
  %2740 = vmatprep.subr.mxu0 0.0
  %2741 = vmatpush1.msra.mxu0 %v2642
  %2742 = vmatprep.subr.mxu0 0.0
  %2743 = vmatpush1.msra.mxu0 %v2643
  %2744 = vmatprep.subr.mxu0 0.0
  %2745 = vmatpush1.msra.mxu0 %v2644
  %2746 = vmatprep.subr.mxu0 0.0
  %2747 = vmatpush1.msra.mxu0 %v2645
  %2748 = vmatprep.subr.mxu0 0.0
  %2749 = vmatpush1.msra.mxu0 %v2646
  %2750 = vmatprep.subr.mxu0 0.0
  %2751 = vmatpush1.msra.mxu0 %v2647
  %2752 = vmatprep.subr.mxu0 0.0
  %2753 = vmatpush1.msra.mxu0 %v2648
  %2754 = vmatprep.subr.mxu0 0.0
  %2755 = vmatpush1.msra.mxu0 %v2649
  %2756 = vmatprep.subr.mxu0 0.0
  %2757 = vmatpush1.msra.mxu0 %v2650
  %2758 = vmatprep.subr.mxu0 0.0
  %2759 = vmatpush1.msra.mxu0 %v2651
  %2760 = vmatprep.subr.mxu0 0.0
  %2761 = vmatpush1.msra.mxu0 %v2652
  %2762 = vmatprep.subr.mxu0 0.0
  %2763 = vmatpush1.msra.mxu0 %v2653
  %2764 = vmatprep.subr.mxu0 0.0
  %2765 = vmatpush1.msra.mxu0 %v2654
  %2766 = vmatprep.subr.mxu0 0.0
  %2767 = vmatpush1.msra.mxu0 %v2655
  %2768 = vmatprep.subr.mxu0 0.0
  %2769 = vmatpush1.msra.mxu0 %v2656
  %2770 = vmatprep.subr.mxu0 0.0
  %2771 = vmatpush1.msra.mxu0 %v2657
  %2772 = vmatprep.subr.mxu0 0.0
  %2773 = vmatpush1.msra.mxu0 0.0
  %2774 = vmatprep.subr.mxu0 0.0
  %2775 = vmatpush1.msra.mxu0 0.0
  %2776 = vmatprep.subr.mxu0 0.0
  %2777 = vmatpush1.msra.mxu0 0.0
  %2778 = vmatprep.subr.mxu0 0.0
  %2779 = vmatpush1.msra.mxu0 0.0
  %2780 = vmatprep.subr.mxu0 0.0
  %2781 = vmatpush1.msra.mxu0 0.0
  %2782 = vmatprep.subr.mxu0 0.0
  %2783 = vmatpush1.msra.mxu0 0.0
  %2784 = vmatprep.subr.mxu0 0.0
  %2785 = vmatpush1.msra.mxu0 0.0
  %2786 = vmatprep.subr.mxu0 0.0
  %2787 = vmatpush1.msra.mxu0 0.0
  %2788 = vmatprep.subr.mxu0 0.0
  %2789 = vmatpush1.msra.mxu0 0.0
  %2790 = vmatprep.subr.mxu0 0.0
  %2791 = vmatpush1.msra.mxu0 0.0
  %2792 = vmatprep.subr.mxu0 0.0
  %2793 = vmatpush1.msra.mxu0 0.0
  %2794 = vmatprep.subr.mxu0 0.0
  %2795 = vmatpush1.msra.mxu0 0.0
  %2796 = vmatprep.subr.mxu0 0.0
  %2797 = vmatpush1.msra.mxu0 0.0
  %2798 = vmatprep.subr.mxu0 0.0
  %2799 = vmatpush1.msra.mxu0 0.0
  %2800 = vmatprep.subr.mxu0 0.0
  %2801 = vmatpush1.msra.mxu0 0.0
  %2802 = vmatprep.subr.mxu0 0.0
  %2803 = vmatpush1.msra.mxu0 0.0
  %2804 = vmatprep.mubr.f32.mxu0 0.0
  %2805 = vmatmul.mubr.f32.gmra.mrb[0].mxu0 %v2606
  %v2806 = vpop.f32.mrb[0].mxu0
  %v2807 = vadd.f32 %v2732, %v2806
  %v2808 = vpop.f32.mrb[0].mxu0
  %2809 = vmatprep.mubr.f32.mxu0 0.0
  %2810 = vmatmul.mubr.f32.gmra.mrb[0].mxu0 %v2609
  %v2811 = vpop.f32.mrb[0].mxu0
  %v2812 = vadd.f32 %v2737, %v2811
  %v2813 = vpop.f32.mrb[0].mxu0
  %2814 = vdwg.mxu0
  %vm2815 = vcmask 31744
  %2816 = vst.msk [vmem:[%s5] sm:$0xff] %vm2815, %v2807
  %2817 = vst.msk [vmem:[%s5 + $0x8] sm:$0xff] %vm2815, %v2812
  // Predicated region
  $region22: #{tpu_custom_call.1} parent=0 // pred_check
    _
  $region23: #{tpu_custom_call.1} parent=0 // pred_check_branch
    %2819 = sbr.rel (0) target = $region25
  $region24: #{tpu_custom_call.1} parent=0 // pred_region
    _
  $region25: #{tpu_custom_call.1} parent=0 // pred_fallthru
    _
  // Predicated region
  $region26: #{tpu_custom_call.1} parent=0 // pred_check
    _
  $region27: #{tpu_custom_call.1} parent=0 // pred_check_branch
    %2821 = sbr.rel (0) target = $region29
  $region28: #{tpu_custom_call.1} parent=0 // pred_region
    _
  $region29: #{tpu_custom_call.1} parent=0 // pred_fallthru
    _

</llo_original>
